<compile_context>
chip_gen: v5e
topology: v5e:2x2
jax: 0.10.0
libtpu: 0.0.40
codegen_flags: <defaults>
</compile_context>

<pallas_src>
import functools

import jax
import jax.numpy as jnp
from jax.experimental import pallas as pl
from jax.experimental.pallas import tpu as pltpu


# ----------------------------------------------------------------------------
# Device / tiling configuration.
# ----------------------------------------------------------------------------
def _round_up(x, m):
    return ((x + m - 1) // m) * m


def _device_kind():
    try:
        return jax.devices()[0].device_kind.lower()
    except Exception:  # pragma: no cover - defensive
        return ""


_KIND = _device_kind()
_IS_V7 = "v7" in _KIND
# VMEM-sized (not MXU-sized) tile preferences; (512,512,1024) uses ~8 MiB of
# double-buffered VMEM, comfortably inside 64 MiB (v7x) / 128 MiB (v5e/v6e).
_TM_PREF, _TN_PREF, _TK_PREF = 512, 512, 1024
_TK_COLLAPSE_MAX = 2048          # let tk grow to full K up to this (kills the K loop)
_VMEM_CAP = (48 << 20) if _IS_V7 else (100 << 20)


def _plan_n_k_tiles(N, K):
    """Weight-side tiling — computable once at module init (independent of M)."""
    tn = min(_TN_PREF, _round_up(N, 128))
    Np = _round_up(N, tn)
    K128 = _round_up(K, 128)
    tk = K128 if K128 <= _TK_COLLAPSE_MAX else _TK_PREF
    Kp = _round_up(K, tk)
    return tn, Np, tk, Kp


def _plan_m_tile(M, tn, Np):
    """Activation-side tiling + v7x two-TensorCore guarantee (per forward)."""
    tm = min(_TM_PREF, _round_up(M, 16))       # 16: bf16 sublane packing
    if _IS_V7:
        # Guarantee >=2 parallel (i, j) tiles so both v7x TensorCores get work.
        if pl.cdiv(M, tm) * (Np // tn) < 2:
            if tn >= 256 and Np % (tn // 2) == 0:
                tn //= 2                        # no weight re-padding needed
            elif tm >= 32:
                tm = _round_up(tm // 2, 16)
            # TODO(synk): else split K across cores with a partial-sum epilogue.
    return tm, tn


# ----------------------------------------------------------------------------
# Pallas kernel: tiled matmul + bias, accumulating directly in the resident
# f32 output tile (no scratch, bias added exactly once at k == 0).
# ----------------------------------------------------------------------------
def _linear_kernel(x_ref, w_ref, b_ref, o_ref):
    @pl.when(pl.program_id(2) == 0)
    def _init():
        # Seed the resident f32 output tile with the broadcast bias.
        o_ref[...] = jnp.broadcast_to(b_ref[...], o_ref.shape)

    # f32 activations cast to bf16 in-register (no separate bf16 copy in HBM);
    # bf16 x bf16 -> f32 accumulation on the MXU.
    o_ref[...] += jnp.dot(x_ref[...].astype(jnp.bfloat16), w_ref[...],
                          preferred_element_type=jnp.float32)


@functools.partial(jax.jit, static_argnames=("n_out", "tm", "tn", "tk"))
def _linear_fwd(x, wp, bp, *, n_out, tm, tn, tk):
    """y = x @ W + b with pre-cast/pre-padded wp (bf16 [Kp,Np]) and bp (f32 [1,Np])."""
    M, K = x.shape
    Kp, Np = wp.shape
    Mp = _round_up(M, tm)
    xp = jnp.pad(x, ((0, Mp - M), (0, Kp - K)))     # stays f32; cast is in-kernel

    grid = (Mp // tm, Np // tn, Kp // tk)

    # Honest double-buffered VMEM budget (+ headroom), per-generation cap.
    vmem_bytes = 2 * (tm * tk * 4 + tk * tn * 2 + tn * 4 + tm * tn * 4)
    vmem_limit = int(min(max(2 * vmem_bytes, 32 << 20), _VMEM_CAP))

    out = pl.pallas_call(
        _linear_kernel,
        out_shape=jax.ShapeDtypeStruct((Mp, Np), jnp.float32),
        grid=grid,
        in_specs=[
            pl.BlockSpec((tm, tk), lambda i, j, k: (i, k)),   # x  (f32)
            pl.BlockSpec((tk, tn), lambda i, j, k: (k, j)),   # W  (bf16, cached)
            pl.BlockSpec((1, tn), lambda i, j, k: (0, j)),    # b  (f32, cached)
        ],
        out_specs=pl.BlockSpec((tm, tn), lambda i, j, k: (i, j)),
        compiler_params=pltpu.CompilerParams(
            dimension_semantics=("parallel", "parallel", "arbitrary"),
            vmem_limit_bytes=vmem_limit,
        ),
        cost_estimate=pl.CostEstimate(
            flops=2 * M * K * n_out,
            transcendentals=0,
            bytes_accessed=M * K * 4 + K * n_out * 2 + n_out * 4 + M * n_out * 4,
        ),
    )(xp, wp, bp)
    return out[:M, :n_out]


# ----------------------------------------------------------------------------
# Module hierarchy mirroring: real_module <- DDP-like wrapper <- ModuleProxyWrapper
# ----------------------------------------------------------------------------
class InnerLinearModule:
    """The twice-wrapped 'real' module (synthetic: Linear)."""

    def __init__(self, d_in, d_out):
        kw = jax.random.PRNGKey(42)
        k_w, k_b = jax.random.split(kw)
        scale = 1.0 / jnp.sqrt(jnp.float32(d_in))
        self.weight = jax.random.normal(k_w, (d_in, d_out), jnp.float32) * scale
        self.bias = jax.random.normal(k_b, (d_out,), jnp.float32) * scale
        self._refresh_cache()

    def _refresh_cache(self):
        """Cast+pad the weights once; forward reuses the cached bf16/f32 copies."""
        K, N = self.weight.shape
        tn, Np, tk, Kp = _plan_n_k_tiles(N, K)
        self._tn, self._tk, self._Np = tn, tk, Np
        self._wp = jnp.pad(self.weight.astype(jnp.bfloat16),
                           ((0, Kp - K), (0, Np - N)))
        self._bp = jnp.pad(self.bias.astype(jnp.float32).reshape(1, N),
                           ((0, 0), (0, Np - N)))

    def forward(self, x):
        M = x.shape[0]
        N = self.weight.shape[1]
        tm, tn = _plan_m_tile(M, self._tn, self._Np)
        return _linear_fwd(x.astype(jnp.float32), self._wp, self._bp,
                           n_out=N, tm=tm, tn=tn, tk=self._tk)

    def __call__(self, *args, **kwargs):
        return self.forward(*args, **kwargs)

    def state_dict(self):
        return {"weight": self.weight, "bias": self.bias}

    def load_state_dict(self, sd):
        self.weight = sd["weight"]
        self.bias = sd["bias"]
        self._refresh_cache()


class DDPLikeWrapper:
    """Stand-in for torch DistributedDataParallel: has `.module`, forwards the call."""
    # TODO(synk): DDP gradient synchronization has no forward-pass Pallas equivalent.

    def __init__(self, module):
        self.module = module

    def forward(self, *args, **kwargs):
        return self.module(*args, **kwargs)

    def __call__(self, *args, **kwargs):
        return self.forward(*args, **kwargs)


class ModuleProxyWrapper:
    """Faithful port of the PyTorch ModuleProxyWrapper: pure delegation."""

    def __init__(self, module):
        assert hasattr(module, "module"), (
            "ModuleProxyWrapper expects input to wrap another module")
        object.__setattr__(self, "module", module)

    def __getattr__(self, name):
        module = object.__getattribute__(self, "module")
        try:
            return getattr(module, name)
        except AttributeError:
            return getattr(module.module, name)

    def state_dict(self, *args, **kwargs):
        return self.module.module.state_dict(*args, **kwargs)

    def load_state_dict(self, *args, **kwargs):
        return self.module.module.load_state_dict(*args, **kwargs)

    def forward(self, *args, **kwargs):
        # The wrapper itself has no compute; forward is delegation.
        return self.module(*args, **kwargs)

    def __call__(self, *args, **kwargs):
        return self.forward(*args, **kwargs)


if __name__ == "__main__":
    # Small but tiling-exercising shapes: K collapses to one grid step,
    # M/N exercise the parallel tiles (and the v7x two-core split path).
    B, D_in, D_out = 128, 1024, 256
    key = jax.random.PRNGKey(0)
    x = jax.random.normal(key, (B, D_in), jnp.float32)

    inner = InnerLinearModule(D_in, D_out)
    ddp_like = DDPLikeWrapper(inner)
    proxy = ModuleProxyWrapper(ddp_like)

    y = proxy(x)
    jax.block_until_ready(y)

    # Correctness: delegated forward matches the plain f32 reference
    # (tolerance accounts for bf16 operand quantization; accumulation is f32).
    y_ref = x @ inner.weight + inner.bias
    assert y.shape == (B, D_out)
    assert jnp.allclose(y, y_ref, atol=2e-2, rtol=2e-2), float(
        jnp.max(jnp.abs(y - y_ref)))

    # Exercise state_dict forwarding (delegates to the twice-wrapped module).
    sd = proxy.state_dict()
    assert set(sd.keys()) == {"weight", "bias"}
    proxy.load_state_dict(sd)
    y2 = proxy(x)
    jax.block_until_ready(y2)
    assert jnp.allclose(y2, y, atol=1e-6)

    print("KERNEL_OK")
</pallas_src>

<mosaic_0001>
module attributes {stable_mosaic.version = 11 : i64} {
  func.func @_linear_kernel(%arg0: i32, %arg1: i32, %arg2: i32, %arg3: memref<128x1024xf32, #tpu.memory_space<vmem>>, %arg4: memref<1024x256xbf16, #tpu.memory_space<vmem>>, %arg5: memref<1x256xf32, #tpu.memory_space<vmem>>, %arg6: memref<128x256xf32, #tpu.memory_space<vmem>>) attributes {dimension_semantics = [#tpu.dimension_semantics<parallel>, #tpu.dimension_semantics<parallel>, #tpu.dimension_semantics<arbitrary>], iteration_bounds = array<i64: 1, 1, 1>, scalar_prefetch = 0 : i64, scratch_operands = 0 : i64, tpu.core_type = #tpu.core_type<tc>, window_params = [{transform_indices = @transform_0, window_bounds = array<i64: 128, 1024>}, {transform_indices = @transform_1, window_bounds = array<i64: 1024, 256>}, {transform_indices = @transform_2, window_bounds = array<i64: 1, 256>}, {transform_indices = @transform_3, window_bounds = array<i64: 128, 256>}]} {
    %c0_i32 = arith.constant 0 : i32
    %0 = arith.cmpi eq, %arg2, %c0_i32 : i32
    %1 = arith.extui %0 : i1 to i32
    %c0_i32_0 = arith.constant 0 : i32
    %2 = arith.cmpi ne, %1, %c0_i32_0 : i32
    scf.if %2 {
      %c0_8 = arith.constant 0 : index
      %c0_9 = arith.constant 0 : index
      %10 = vector.load %arg5[%c0_8, %c0_9] : memref<1x256xf32, #tpu.memory_space<vmem>>, vector<1x256xf32>
      %11 = vector.shape_cast %10 : vector<1x256xf32> to vector<1x256xf32>
      %12 = vector.broadcast %11 : vector<1x256xf32> to vector<128x256xf32>
      %c0_10 = arith.constant 0 : index
      %c0_11 = arith.constant 0 : index
      %13 = vector.load %arg6[%c0_10, %c0_11] : memref<128x256xf32, #tpu.memory_space<vmem>>, vector<128x256xf32>
      tpu.vector_store %arg6[%c0_10, %c0_11], %12 {strides = array<i32>} : memref<128x256xf32, #tpu.memory_space<vmem>>, vector<128x256xf32>,
    } else {
    }
    %c0 = arith.constant 0 : index
    %c0_1 = arith.constant 0 : index
    %3 = vector.load %arg6[%c0, %c0_1] : memref<128x256xf32, #tpu.memory_space<vmem>>, vector<128x256xf32>
    %c0_2 = arith.constant 0 : index
    %c0_3 = arith.constant 0 : index
    %4 = vector.load %arg3[%c0_2, %c0_3] : memref<128x1024xf32, #tpu.memory_space<vmem>>, vector<128x1024xf32>
    %5 = arith.truncf %4 : vector<128x1024xf32> to vector<128x1024xbf16>
    %c0_4 = arith.constant 0 : index
    %c0_5 = arith.constant 0 : index
    %6 = vector.load %arg4[%c0_4, %c0_5] : memref<1024x256xbf16, #tpu.memory_space<vmem>>, vector<1024x256xbf16>
    %cst = arith.constant dense<0.000000e+00> : vector<128x256xf32>
    %7 = tpu.matmul %5, %6, %cst {dimension_numbers = #tpu.dot_dimension_numbers<[1], [0], [0], [1], [0, 0, 1, 1], [], []>} : vector<128x1024xbf16>, vector<1024x256xbf16>, vector<128x256xf32> -> vector<128x256xf32>
    %8 = arith.addf %3, %7 : vector<128x256xf32>
    %c0_6 = arith.constant 0 : index
    %c0_7 = arith.constant 0 : index
    %9 = vector.load %arg6[%c0_6, %c0_7] : memref<128x256xf32, #tpu.memory_space<vmem>>, vector<128x256xf32>
    tpu.vector_store %arg6[%c0_6, %c0_7], %8 {strides = array<i32>} : memref<128x256xf32, #tpu.memory_space<vmem>>, vector<128x256xf32>,
    return
  }
  func.func @transform_0(%arg0: i32, %arg1: i32, %arg2: i32) -> (i32, i32) {
    %c0_i32 = arith.constant 0 : i32
    return %arg0, %arg2 : i32, i32
  }
  func.func @transform_1(%arg0: i32, %arg1: i32, %arg2: i32) -> (i32, i32) {
    %c0_i32 = arith.constant 0 : i32
    return %arg2, %arg1 : i32, i32
  }
  func.func @transform_2(%arg0: i32, %arg1: i32, %arg2: i32) -> (i32, i32) {
    %c0_i32 = arith.constant 0 : i32
    %c0_i32_0 = arith.constant 0 : i32
    return %c0_i32, %arg1 : i32, i32
  }
  func.func @transform_3(%arg0: i32, %arg1: i32, %arg2: i32) -> (i32, i32) {
    %c0_i32 = arith.constant 0 : i32
    return %arg0, %arg1 : i32, i32
  }
}

</mosaic_0001>

<llo_original>
// kernel: _linear_fwd.1
$region0: #{_linear_fwd.1}
  #allocation0 [shape = 'u32[]', space=smem, size = 0x4, offset = 0x4, fixed_abs, tag = 'smem constant byte address 0x4 - core index']
  #allocation1 [shape = 'u32[72,128]{1,0:T(1,128)}', space=vmem, size = 0x9000, scoped, tag = 'internal scratch']
  %s0 = inlined_call_operand.hbm [shape: f32[128,1024], index: 0, kind: input, shape index: {}]
  %s1 = inlined_call_operand.hbm [shape: bf16[1024,256], index: 1, kind: input, shape index: {}]
  %s2 = inlined_call_operand.hbm [shape: f32[1,256], index: 2, kind: input, shape index: {}]
  %s3 = inlined_call_operand.hbm [shape: f32[128,256], index: 3, kind: output, shape index: {}]
  %s4 = sld [smem:[#allocation0]]
  $region38: #{_linear_fwd.1} parent=0
    _
  %s6 = ssub.s32 1, %s4
  %s7 = scalar_select 0, %s6, %s4
  $region1: #{_linear_fwd.1} parent=0
    #allocation2 [shape = 'u8[524288]{0}', space=vmem, size = 0x80000, scoped, tag = 'input window, operand 0, single buffered']
    #allocation3 [shape = 's32[1]{0}', space=sflag, size = 0x4, scoped, tag = 'scoped memory for _linear_fwd.1']
    #allocation4 [shape = 's32[1]{0}', space=sflag, size = 0x4, scoped, tag = 'scoped memory for _linear_fwd.1']
    #allocation5 [shape = 'u8[524288]{0}', space=vmem, size = 0x80000, scoped, tag = 'input window, operand 1, single buffered']
    #allocation6 [shape = 's32[1]{0}', space=sflag, size = 0x4, scoped, tag = 'scoped memory for _linear_fwd.1']
    #allocation7 [shape = 'u8[1024]{0}', space=vmem, size = 0x400, scoped, tag = 'input window, operand 2, single buffered']
    #allocation8 [shape = 'u8[131072]{0}', space=vmem, size = 0x20000, scoped, tag = 'output window, operand 0, single buffered']
    %8 = vsyncpa [#allocation3], 0
    %9 = vsyncpa [#allocation6], 0
    %10 = vsyncpa [#allocation4], 0
    // Predicated region
    $region2: #{_linear_fwd.1} parent=1 // pred_check
      _
    $region3: #{_linear_fwd.1} parent=1 // pred_check_branch
      %12 = sbr.rel (0) target = $region5
    $region4: #{_linear_fwd.1} parent=1 // pred_region
      %14 = vsyncadd [#allocation3], 0
      %s15 = sshll.u32 %s0, 4
      %s16 = int_to_ptr.hbm [resolvable:$true] %s15
      %s17 = sshll.u32 [#allocation2], 4
      %s18 = int_to_ptr.vmem [resolvable:$true] %s17
      %23 = dma.hbm_to_vmem [thread:$0]  %s16, 16384, %s18, [#allocation3], 1024, 1024, 64
    $region5: #{_linear_fwd.1} parent=1 // pred_fallthru
      _
    // Predicated region
    $region6: #{_linear_fwd.1} parent=1 // pred_check
      _
    $region7: #{_linear_fwd.1} parent=1 // pred_check_branch
      %25 = sbr.rel (0) target = $region9
    $region8: #{_linear_fwd.1} parent=1 // pred_region
      %27 = vsyncadd [#allocation6], 0
      %s28 = sshll.u32 %s1, 4
      %s29 = int_to_ptr.hbm [resolvable:$true] %s28
      %s30 = sshll.u32 [#allocation5], 4
      %s31 = int_to_ptr.vmem [resolvable:$true] %s30
      %36 = dma.hbm_to_vmem [thread:$0]  %s29, 16384, %s31, [#allocation6], 128, 128, 8
    $region9: #{_linear_fwd.1} parent=1 // pred_fallthru
      _
    // Predicated region
    $region10: #{_linear_fwd.1} parent=1 // pred_check
      _
    $region11: #{_linear_fwd.1} parent=1 // pred_check_branch
      %38 = sbr.rel (0) target = $region13
    $region12: #{_linear_fwd.1} parent=1 // pred_region
      %40 = vsyncadd [#allocation6], 0
      %s42 = sshll.u32 %s2, 4
      %s43 = int_to_ptr.hbm [resolvable:$true] %s42
      %s44 = sshll.u32 [#allocation7], 4
      %s45 = int_to_ptr.vmem [resolvable:$true] %s44
      %47 = dma.hbm_to_vmem [thread:$0]  %s43, 32, %s45, [#allocation6]
    $region13: #{_linear_fwd.1} parent=1 // pred_fallthru
      _
    // Predicated region
    $region14: #{_linear_fwd.1} parent=1 // pred_check
      _
    $region15: #{_linear_fwd.1} parent=1 // pred_check_branch
      %49 = sbr.rel (0) target = $region17
    $region16: #{_linear_fwd.1} parent=1 // pred_region
      %51 = dma.done [#allocation3], 16384
    $region17: #{_linear_fwd.1} parent=1 // pred_fallthru
      _
    // Predicated region
    $region18: #{_linear_fwd.1} parent=1 // pred_check
      _
    $region19: #{_linear_fwd.1} parent=1 // pred_check_branch
      %53 = sbr.rel (0) target = $region21
    $region20: #{_linear_fwd.1} parent=1 // pred_region
      %55 = dma.done [#allocation6], 16384
    $region21: #{_linear_fwd.1} parent=1 // pred_fallthru
      _
    // Predicated region
    $region22: #{_linear_fwd.1} parent=1 // pred_check
      _
    $region23: #{_linear_fwd.1} parent=1 // pred_check_branch
      %57 = sbr.rel (0) target = $region25
    $region24: #{_linear_fwd.1} parent=1 // pred_region
      %59 = dma.done [#allocation6], 32
    $region25: #{_linear_fwd.1} parent=1 // pred_fallthru
      _
    %p60 = scmp.eq.s32.totalorder 0, 0
    // Predicated region
    $region26: #{_linear_fwd.1} parent=1 // pred_check
      %p61 = pneg %p60
    $region27: #{_linear_fwd.1} parent=1 // pred_check_branch
      %63 = sbr.rel (%p61) target = $region29
    $region28: #{_linear_fwd.1} parent=1 // pred_region
      %v64 = vld [vmem:[#allocation7] sm:$0x3]
      %v66 = vperm.slane %v64, 0
      %v67 = vperm.slane %v64, 1
      %70 = vst [vmem:[#allocation8] sm:$0xff] %v66
      %71 = vst [vmem:[#allocation8 + $0x8] sm:$0xff] %v67
      %72 = vst [vmem:[#allocation8 + $0x10] sm:$0xff] %v66
      %73 = vst [vmem:[#allocation8 + $0x18] sm:$0xff] %v67
      %74 = vst [vmem:[#allocation8 + $0x20] sm:$0xff] %v66
      %75 = vst [vmem:[#allocation8 + $0x28] sm:$0xff] %v67
      %76 = vst [vmem:[#allocation8 + $0x30] sm:$0xff] %v66
      %77 = vst [vmem:[#allocation8 + $0x38] sm:$0xff] %v67
      %78 = vst [vmem:[#allocation8 + $0x40] sm:$0xff] %v66
      %79 = vst [vmem:[#allocation8 + $0x48] sm:$0xff] %v67
      %80 = vst [vmem:[#allocation8 + $0x50] sm:$0xff] %v66
      %81 = vst [vmem:[#allocation8 + $0x58] sm:$0xff] %v67
      %82 = vst [vmem:[#allocation8 + $0x60] sm:$0xff] %v66
      %83 = vst [vmem:[#allocation8 + $0x68] sm:$0xff] %v67
      %84 = vst [vmem:[#allocation8 + $0x70] sm:$0xff] %v66
      %85 = vst [vmem:[#allocation8 + $0x78] sm:$0xff] %v67
      %86 = vst [vmem:[#allocation8 + $0x80] sm:$0xff] %v66
      %87 = vst [vmem:[#allocation8 + $0x88] sm:$0xff] %v67
      %88 = vst [vmem:[#allocation8 + $0x90] sm:$0xff] %v66
      %89 = vst [vmem:[#allocation8 + $0x98] sm:$0xff] %v67
      %90 = vst [vmem:[#allocation8 + $0xa0] sm:$0xff] %v66
      %91 = vst [vmem:[#allocation8 + $0xa8] sm:$0xff] %v67
      %92 = vst [vmem:[#allocation8 + $0xb0] sm:$0xff] %v66
      %93 = vst [vmem:[#allocation8 + $0xb8] sm:$0xff] %v67
      %94 = vst [vmem:[#allocation8 + $0xc0] sm:$0xff] %v66
      %95 = vst [vmem:[#allocation8 + $0xc8] sm:$0xff] %v67
      %96 = vst [vmem:[#allocation8 + $0xd0] sm:$0xff] %v66
      %97 = vst [vmem:[#allocation8 + $0xd8] sm:$0xff] %v67
      %98 = vst [vmem:[#allocation8 + $0xe0] sm:$0xff] %v66
      %99 = vst [vmem:[#allocation8 + $0xe8] sm:$0xff] %v67
      %100 = vst [vmem:[#allocation8 + $0xf0] sm:$0xff] %v66
      %101 = vst [vmem:[#allocation8 + $0xf8] sm:$0xff] %v67
    $region29: #{_linear_fwd.1} parent=1 // pred_fallthru
      _
    %v102 = vld [vmem:[#allocation8] sm:$0xff]
    %v103 = vld [vmem:[#allocation8 + $0x8] sm:$0xff]
    %v104 = vld [vmem:[#allocation8 + $0x10] sm:$0xff]
    %v105 = vld [vmem:[#allocation8 + $0x18] sm:$0xff]
    %v106 = vld [vmem:[#allocation8 + $0x20] sm:$0xff]
    %v107 = vld [vmem:[#allocation8 + $0x28] sm:$0xff]
    %v108 = vld [vmem:[#allocation8 + $0x30] sm:$0xff]
    %v109 = vld [vmem:[#allocation8 + $0x38] sm:$0xff]
    %v110 = vld [vmem:[#allocation8 + $0x40] sm:$0xff]
    %v111 = vld [vmem:[#allocation8 + $0x48] sm:$0xff]
    %v112 = vld [vmem:[#allocation8 + $0x50] sm:$0xff]
    %v113 = vld [vmem:[#allocation8 + $0x58] sm:$0xff]
    %v114 = vld [vmem:[#allocation8 + $0x60] sm:$0xff]
    %v115 = vld [vmem:[#allocation8 + $0x68] sm:$0xff]
    %v116 = vld [vmem:[#allocation8 + $0x70] sm:$0xff]
    %v117 = vld [vmem:[#allocation8 + $0x78] sm:$0xff]
    %v118 = vld [vmem:[#allocation8 + $0x80] sm:$0xff]
    %v119 = vld [vmem:[#allocation8 + $0x88] sm:$0xff]
    %v120 = vld [vmem:[#allocation8 + $0x90] sm:$0xff]
    %v121 = vld [vmem:[#allocation8 + $0x98] sm:$0xff]
    %v122 = vld [vmem:[#allocation8 + $0xa0] sm:$0xff]
    %v123 = vld [vmem:[#allocation8 + $0xa8] sm:$0xff]
    %v124 = vld [vmem:[#allocation8 + $0xb0] sm:$0xff]
    %v125 = vld [vmem:[#allocation8 + $0xb8] sm:$0xff]
    %v126 = vld [vmem:[#allocation8 + $0xc0] sm:$0xff]
    %v127 = vld [vmem:[#allocation8 + $0xc8] sm:$0xff]
    %v128 = vld [vmem:[#allocation8 + $0xd0] sm:$0xff]
    %v129 = vld [vmem:[#allocation8 + $0xd8] sm:$0xff]
    %v130 = vld [vmem:[#allocation8 + $0xe0] sm:$0xff]
    %v131 = vld [vmem:[#allocation8 + $0xe8] sm:$0xff]
    %v132 = vld [vmem:[#allocation8 + $0xf0] sm:$0xff]
    %v133 = vld [vmem:[#allocation8 + $0xf8] sm:$0xff]
    %v134 = vld [vmem:[#allocation2] sm:$0xff]
    %v135 = vld [vmem:[#allocation2 + $0x8] sm:$0xff]
    %v136 = vld [vmem:[#allocation2 + $0x10] sm:$0xff]
    %v137 = vld [vmem:[#allocation2 + $0x18] sm:$0xff]
    %v138 = vld [vmem:[#allocation2 + $0x20] sm:$0xff]
    %v139 = vld [vmem:[#allocation2 + $0x28] sm:$0xff]
    %v140 = vld [vmem:[#allocation2 + $0x30] sm:$0xff]
    %v141 = vld [vmem:[#allocation2 + $0x38] sm:$0xff]
    %v142 = vld [vmem:[#allocation2 + $0x40] sm:$0xff]
    %v143 = vld [vmem:[#allocation2 + $0x48] sm:$0xff]
    %v144 = vld [vmem:[#allocation2 + $0x50] sm:$0xff]
    %v145 = vld [vmem:[#allocation2 + $0x58] sm:$0xff]
    %v146 = vld [vmem:[#allocation2 + $0x60] sm:$0xff]
    %v147 = vld [vmem:[#allocation2 + $0x68] sm:$0xff]
    %v148 = vld [vmem:[#allocation2 + $0x70] sm:$0xff]
    %v149 = vld [vmem:[#allocation2 + $0x78] sm:$0xff]
    %v150 = vld [vmem:[#allocation2 + $0x80] sm:$0xff]
    %v151 = vld [vmem:[#allocation2 + $0x88] sm:$0xff]
    %v152 = vld [vmem:[#allocation2 + $0x90] sm:$0xff]
    %v153 = vld [vmem:[#allocation2 + $0x98] sm:$0xff]
    %v154 = vld [vmem:[#allocation2 + $0xa0] sm:$0xff]
    %v155 = vld [vmem:[#allocation2 + $0xa8] sm:$0xff]
    %v156 = vld [vmem:[#allocation2 + $0xb0] sm:$0xff]
    %v157 = vld [vmem:[#allocation2 + $0xb8] sm:$0xff]
    %v158 = vld [vmem:[#allocation2 + $0xc0] sm:$0xff]
    %v159 = vld [vmem:[#allocation2 + $0xc8] sm:$0xff]
    %v160 = vld [vmem:[#allocation2 + $0xd0] sm:$0xff]
    %v161 = vld [vmem:[#allocation2 + $0xd8] sm:$0xff]
    %v162 = vld [vmem:[#allocation2 + $0xe0] sm:$0xff]
    %v163 = vld [vmem:[#allocation2 + $0xe8] sm:$0xff]
    %v164 = vld [vmem:[#allocation2 + $0xf0] sm:$0xff]
    %v165 = vld [vmem:[#allocation2 + $0xf8] sm:$0xff]
    %v166 = vld [vmem:[#allocation2 + $0x100] sm:$0xff]
    %v167 = vld [vmem:[#allocation2 + $0x108] sm:$0xff]
    %v168 = vld [vmem:[#allocation2 + $0x110] sm:$0xff]
    %v169 = vld [vmem:[#allocation2 + $0x118] sm:$0xff]
    %v170 = vld [vmem:[#allocation2 + $0x120] sm:$0xff]
    %v171 = vld [vmem:[#allocation2 + $0x128] sm:$0xff]
    %v172 = vld [vmem:[#allocation2 + $0x130] sm:$0xff]
    %v173 = vld [vmem:[#allocation2 + $0x138] sm:$0xff]
    %v174 = vld [vmem:[#allocation2 + $0x140] sm:$0xff]
    %v175 = vld [vmem:[#allocation2 + $0x148] sm:$0xff]
    %v176 = vld [vmem:[#allocation2 + $0x150] sm:$0xff]
    %v177 = vld [vmem:[#allocation2 + $0x158] sm:$0xff]
    %v178 = vld [vmem:[#allocation2 + $0x160] sm:$0xff]
    %v179 = vld [vmem:[#allocation2 + $0x168] sm:$0xff]
    %v180 = vld [vmem:[#allocation2 + $0x170] sm:$0xff]
    %v181 = vld [vmem:[#allocation2 + $0x178] sm:$0xff]
    %v182 = vld [vmem:[#allocation2 + $0x180] sm:$0xff]
    %v183 = vld [vmem:[#allocation2 + $0x188] sm:$0xff]
    %v184 = vld [vmem:[#allocation2 + $0x190] sm:$0xff]
    %v185 = vld [vmem:[#allocation2 + $0x198] sm:$0xff]
    %v186 = vld [vmem:[#allocation2 + $0x1a0] sm:$0xff]
    %v187 = vld [vmem:[#allocation2 + $0x1a8] sm:$0xff]
    %v188 = vld [vmem:[#allocation2 + $0x1b0] sm:$0xff]
    %v189 = vld [vmem:[#allocation2 + $0x1b8] sm:$0xff]
    %v190 = vld [vmem:[#allocation2 + $0x1c0] sm:$0xff]
    %v191 = vld [vmem:[#allocation2 + $0x1c8] sm:$0xff]
    %v192 = vld [vmem:[#allocation2 + $0x1d0] sm:$0xff]
    %v193 = vld [vmem:[#allocation2 + $0x1d8] sm:$0xff]
    %v194 = vld [vmem:[#allocation2 + $0x1e0] sm:$0xff]
    %v195 = vld [vmem:[#allocation2 + $0x1e8] sm:$0xff]
    %v196 = vld [vmem:[#allocation2 + $0x1f0] sm:$0xff]
    %v197 = vld [vmem:[#allocation2 + $0x1f8] sm:$0xff]
    %v198 = vld [vmem:[#allocation2 + $0x200] sm:$0xff]
    %v199 = vld [vmem:[#allocation2 + $0x208] sm:$0xff]
    %v200 = vld [vmem:[#allocation2 + $0x210] sm:$0xff]
    %v201 = vld [vmem:[#allocation2 + $0x218] sm:$0xff]
    %v202 = vld [vmem:[#allocation2 + $0x220] sm:$0xff]
    %v203 = vld [vmem:[#allocation2 + $0x228] sm:$0xff]
    %v204 = vld [vmem:[#allocation2 + $0x230] sm:$0xff]
    %v205 = vld [vmem:[#allocation2 + $0x238] sm:$0xff]
    %v206 = vld [vmem:[#allocation2 + $0x240] sm:$0xff]
    %v207 = vld [vmem:[#allocation2 + $0x248] sm:$0xff]
    %v208 = vld [vmem:[#allocation2 + $0x250] sm:$0xff]
    %v209 = vld [vmem:[#allocation2 + $0x258] sm:$0xff]
    %v210 = vld [vmem:[#allocation2 + $0x260] sm:$0xff]
    %v211 = vld [vmem:[#allocation2 + $0x268] sm:$0xff]
    %v212 = vld [vmem:[#allocation2 + $0x270] sm:$0xff]
    %v213 = vld [vmem:[#allocation2 + $0x278] sm:$0xff]
    %v214 = vld [vmem:[#allocation2 + $0x280] sm:$0xff]
    %v215 = vld [vmem:[#allocation2 + $0x288] sm:$0xff]
    %v216 = vld [vmem:[#allocation2 + $0x290] sm:$0xff]
    %v217 = vld [vmem:[#allocation2 + $0x298] sm:$0xff]
    %v218 = vld [vmem:[#allocation2 + $0x2a0] sm:$0xff]
    %v219 = vld [vmem:[#allocation2 + $0x2a8] sm:$0xff]
    %v220 = vld [vmem:[#allocation2 + $0x2b0] sm:$0xff]
    %v221 = vld [vmem:[#allocation2 + $0x2b8] sm:$0xff]
    %v222 = vld [vmem:[#allocation2 + $0x2c0] sm:$0xff]
    %v223 = vld [vmem:[#allocation2 + $0x2c8] sm:$0xff]
    %v224 = vld [vmem:[#allocation2 + $0x2d0] sm:$0xff]
    %v225 = vld [vmem:[#allocation2 + $0x2d8] sm:$0xff]
    %v226 = vld [vmem:[#allocation2 + $0x2e0] sm:$0xff]
    %v227 = vld [vmem:[#allocation2 + $0x2e8] sm:$0xff]
    %v228 = vld [vmem:[#allocation2 + $0x2f0] sm:$0xff]
    %v229 = vld [vmem:[#allocation2 + $0x2f8] sm:$0xff]
    %v230 = vld [vmem:[#allocation2 + $0x300] sm:$0xff]
    %v231 = vld [vmem:[#allocation2 + $0x308] sm:$0xff]
    %v232 = vld [vmem:[#allocation2 + $0x310] sm:$0xff]
    %v233 = vld [vmem:[#allocation2 + $0x318] sm:$0xff]
    %v234 = vld [vmem:[#allocation2 + $0x320] sm:$0xff]
    %v235 = vld [vmem:[#allocation2 + $0x328] sm:$0xff]
    %v236 = vld [vmem:[#allocation2 + $0x330] sm:$0xff]
    %v237 = vld [vmem:[#allocation2 + $0x338] sm:$0xff]
    %v238 = vld [vmem:[#allocation2 + $0x340] sm:$0xff]
    %v239 = vld [vmem:[#allocation2 + $0x348] sm:$0xff]
    %v240 = vld [vmem:[#allocation2 + $0x350] sm:$0xff]
    %v241 = vld [vmem:[#allocation2 + $0x358] sm:$0xff]
    %v242 = vld [vmem:[#allocation2 + $0x360] sm:$0xff]
    %v243 = vld [vmem:[#allocation2 + $0x368] sm:$0xff]
    %v244 = vld [vmem:[#allocation2 + $0x370] sm:$0xff]
    %v245 = vld [vmem:[#allocation2 + $0x378] sm:$0xff]
    %v246 = vld [vmem:[#allocation2 + $0x380] sm:$0xff]
    %v247 = vld [vmem:[#allocation2 + $0x388] sm:$0xff]
    %v248 = vld [vmem:[#allocation2 + $0x390] sm:$0xff]
    %v249 = vld [vmem:[#allocation2 + $0x398] sm:$0xff]
    %v250 = vld [vmem:[#allocation2 + $0x3a0] sm:$0xff]
    %v251 = vld [vmem:[#allocation2 + $0x3a8] sm:$0xff]
    %v252 = vld [vmem:[#allocation2 + $0x3b0] sm:$0xff]
    %v253 = vld [vmem:[#allocation2 + $0x3b8] sm:$0xff]
    %v254 = vld [vmem:[#allocation2 + $0x3c0] sm:$0xff]
    %v255 = vld [vmem:[#allocation2 + $0x3c8] sm:$0xff]
    %v256 = vld [vmem:[#allocation2 + $0x3d0] sm:$0xff]
    %v257 = vld [vmem:[#allocation2 + $0x3d8] sm:$0xff]
    %v258 = vld [vmem:[#allocation2 + $0x3e0] sm:$0xff]
    %v259 = vld [vmem:[#allocation2 + $0x3e8] sm:$0xff]
    %v260 = vld [vmem:[#allocation2 + $0x3f0] sm:$0xff]
    %v261 = vld [vmem:[#allocation2 + $0x3f8] sm:$0xff]
    %v262 = vpack.c.bf16 %v142, %v134
    %v263 = vpack.c.bf16 %v143, %v135
    %v264 = vpack.c.bf16 %v144, %v136
    %v265 = vpack.c.bf16 %v145, %v137
    %v266 = vpack.c.bf16 %v146, %v138
    %v267 = vpack.c.bf16 %v147, %v139
    %v268 = vpack.c.bf16 %v148, %v140
    %v269 = vpack.c.bf16 %v149, %v141
    %v270 = vpack.c.bf16 %v158, %v150
    %v271 = vpack.c.bf16 %v159, %v151
    %v272 = vpack.c.bf16 %v160, %v152
    %v273 = vpack.c.bf16 %v161, %v153
    %v274 = vpack.c.bf16 %v162, %v154
    %v275 = vpack.c.bf16 %v163, %v155
    %v276 = vpack.c.bf16 %v164, %v156
    %v277 = vpack.c.bf16 %v165, %v157
    %v278 = vpack.c.bf16 %v174, %v166
    %v279 = vpack.c.bf16 %v175, %v167
    %v280 = vpack.c.bf16 %v176, %v168
    %v281 = vpack.c.bf16 %v177, %v169
    %v282 = vpack.c.bf16 %v178, %v170
    %v283 = vpack.c.bf16 %v179, %v171
    %v284 = vpack.c.bf16 %v180, %v172
    %v285 = vpack.c.bf16 %v181, %v173
    %v286 = vpack.c.bf16 %v190, %v182
    %v287 = vpack.c.bf16 %v191, %v183
    %v288 = vpack.c.bf16 %v192, %v184
    %v289 = vpack.c.bf16 %v193, %v185
    %v290 = vpack.c.bf16 %v194, %v186
    %v291 = vpack.c.bf16 %v195, %v187
    %v292 = vpack.c.bf16 %v196, %v188
    %v293 = vpack.c.bf16 %v197, %v189
    %v294 = vpack.c.bf16 %v206, %v198
    %v295 = vpack.c.bf16 %v207, %v199
    %v296 = vpack.c.bf16 %v208, %v200
    %v297 = vpack.c.bf16 %v209, %v201
    %v298 = vpack.c.bf16 %v210, %v202
    %v299 = vpack.c.bf16 %v211, %v203
    %v300 = vpack.c.bf16 %v212, %v204
    %v301 = vpack.c.bf16 %v213, %v205
    %v302 = vpack.c.bf16 %v222, %v214
    %v303 = vpack.c.bf16 %v223, %v215
    %v304 = vpack.c.bf16 %v224, %v216
    %v305 = vpack.c.bf16 %v225, %v217
    %v306 = vpack.c.bf16 %v226, %v218
    %v307 = vpack.c.bf16 %v227, %v219
    %v308 = vpack.c.bf16 %v228, %v220
    %v309 = vpack.c.bf16 %v229, %v221
    %v310 = vpack.c.bf16 %v238, %v230
    %v311 = vpack.c.bf16 %v239, %v231
    %v312 = vpack.c.bf16 %v240, %v232
    %v313 = vpack.c.bf16 %v241, %v233
    %v314 = vpack.c.bf16 %v242, %v234
    %v315 = vpack.c.bf16 %v243, %v235
    %v316 = vpack.c.bf16 %v244, %v236
    %v317 = vpack.c.bf16 %v245, %v237
    %v318 = vpack.c.bf16 %v254, %v246
    %v319 = vpack.c.bf16 %v255, %v247
    %v320 = vpack.c.bf16 %v256, %v248
    %v321 = vpack.c.bf16 %v257, %v249
    %v322 = vpack.c.bf16 %v258, %v250
    %v323 = vpack.c.bf16 %v259, %v251
    %v324 = vpack.c.bf16 %v260, %v252
    %v325 = vpack.c.bf16 %v261, %v253
    %v326 = vld [vmem:[#allocation5] sm:$0xff]
    %v327 = vld [vmem:[#allocation5 + $0x8] sm:$0xff]
    %v328 = vld [vmem:[#allocation5 + $0x10] sm:$0xff]
    %v329 = vld [vmem:[#allocation5 + $0x18] sm:$0xff]
    %v330 = vld [vmem:[#allocation5 + $0x20] sm:$0xff]
    %v331 = vld [vmem:[#allocation5 + $0x28] sm:$0xff]
    %v332 = vld [vmem:[#allocation5 + $0x30] sm:$0xff]
    %v333 = vld [vmem:[#allocation5 + $0x38] sm:$0xff]
    %v334 = vld [vmem:[#allocation5 + $0x40] sm:$0xff]
    %v335 = vld [vmem:[#allocation5 + $0x48] sm:$0xff]
    %v336 = vld [vmem:[#allocation5 + $0x50] sm:$0xff]
    %v337 = vld [vmem:[#allocation5 + $0x58] sm:$0xff]
    %v338 = vld [vmem:[#allocation5 + $0x60] sm:$0xff]
    %v339 = vld [vmem:[#allocation5 + $0x68] sm:$0xff]
    %v340 = vld [vmem:[#allocation5 + $0x70] sm:$0xff]
    %v341 = vld [vmem:[#allocation5 + $0x78] sm:$0xff]
    %v342 = vld [vmem:[#allocation5 + $0x80] sm:$0xff]
    %v343 = vld [vmem:[#allocation5 + $0x88] sm:$0xff]
    %v344 = vld [vmem:[#allocation5 + $0x90] sm:$0xff]
    %v345 = vld [vmem:[#allocation5 + $0x98] sm:$0xff]
    %v346 = vld [vmem:[#allocation5 + $0xa0] sm:$0xff]
    %v347 = vld [vmem:[#allocation5 + $0xa8] sm:$0xff]
    %v348 = vld [vmem:[#allocation5 + $0xb0] sm:$0xff]
    %v349 = vld [vmem:[#allocation5 + $0xb8] sm:$0xff]
    %v350 = vld [vmem:[#allocation5 + $0xc0] sm:$0xff]
    %v351 = vld [vmem:[#allocation5 + $0xc8] sm:$0xff]
    %v352 = vld [vmem:[#allocation5 + $0xd0] sm:$0xff]
    %v353 = vld [vmem:[#allocation5 + $0xd8] sm:$0xff]
    %v354 = vld [vmem:[#allocation5 + $0xe0] sm:$0xff]
    %v355 = vld [vmem:[#allocation5 + $0xe8] sm:$0xff]
    %v356 = vld [vmem:[#allocation5 + $0xf0] sm:$0xff]
    %v357 = vld [vmem:[#allocation5 + $0xf8] sm:$0xff]
    %v358 = vld [vmem:[#allocation5 + $0x100] sm:$0xff]
    %v359 = vld [vmem:[#allocation5 + $0x108] sm:$0xff]
    %v360 = vld [vmem:[#allocation5 + $0x110] sm:$0xff]
    %v361 = vld [vmem:[#allocation5 + $0x118] sm:$0xff]
    %v362 = vld [vmem:[#allocation5 + $0x120] sm:$0xff]
    %v363 = vld [vmem:[#allocation5 + $0x128] sm:$0xff]
    %v364 = vld [vmem:[#allocation5 + $0x130] sm:$0xff]
    %v365 = vld [vmem:[#allocation5 + $0x138] sm:$0xff]
    %v366 = vld [vmem:[#allocation5 + $0x140] sm:$0xff]
    %v367 = vld [vmem:[#allocation5 + $0x148] sm:$0xff]
    %v368 = vld [vmem:[#allocation5 + $0x150] sm:$0xff]
    %v369 = vld [vmem:[#allocation5 + $0x158] sm:$0xff]
    %v370 = vld [vmem:[#allocation5 + $0x160] sm:$0xff]
    %v371 = vld [vmem:[#allocation5 + $0x168] sm:$0xff]
    %v372 = vld [vmem:[#allocation5 + $0x170] sm:$0xff]
    %v373 = vld [vmem:[#allocation5 + $0x178] sm:$0xff]
    %v374 = vld [vmem:[#allocation5 + $0x180] sm:$0xff]
    %v375 = vld [vmem:[#allocation5 + $0x188] sm:$0xff]
    %v376 = vld [vmem:[#allocation5 + $0x190] sm:$0xff]
    %v377 = vld [vmem:[#allocation5 + $0x198] sm:$0xff]
    %v378 = vld [vmem:[#allocation5 + $0x1a0] sm:$0xff]
    %v379 = vld [vmem:[#allocation5 + $0x1a8] sm:$0xff]
    %v380 = vld [vmem:[#allocation5 + $0x1b0] sm:$0xff]
    %v381 = vld [vmem:[#allocation5 + $0x1b8] sm:$0xff]
    %v382 = vld [vmem:[#allocation5 + $0x1c0] sm:$0xff]
    %v383 = vld [vmem:[#allocation5 + $0x1c8] sm:$0xff]
    %v384 = vld [vmem:[#allocation5 + $0x1d0] sm:$0xff]
    %v385 = vld [vmem:[#allocation5 + $0x1d8] sm:$0xff]
    %v386 = vld [vmem:[#allocation5 + $0x1e0] sm:$0xff]
    %v387 = vld [vmem:[#allocation5 + $0x1e8] sm:$0xff]
    %v388 = vld [vmem:[#allocation5 + $0x1f0] sm:$0xff]
    %v389 = vld [vmem:[#allocation5 + $0x1f8] sm:$0xff]
    %v390 = vld [vmem:[#allocation5 + $0x200] sm:$0xff]
    %v391 = vld [vmem:[#allocation5 + $0x208] sm:$0xff]
    %v392 = vld [vmem:[#allocation5 + $0x210] sm:$0xff]
    %v393 = vld [vmem:[#allocation5 + $0x218] sm:$0xff]
    %v394 = vld [vmem:[#allocation5 + $0x220] sm:$0xff]
    %v395 = vld [vmem:[#allocation5 + $0x228] sm:$0xff]
    %v396 = vld [vmem:[#allocation5 + $0x230] sm:$0xff]
    %v397 = vld [vmem:[#allocation5 + $0x238] sm:$0xff]
    %v398 = vld [vmem:[#allocation5 + $0x240] sm:$0xff]
    %v399 = vld [vmem:[#allocation5 + $0x248] sm:$0xff]
    %v400 = vld [vmem:[#allocation5 + $0x250] sm:$0xff]
    %v401 = vld [vmem:[#allocation5 + $0x258] sm:$0xff]
    %v402 = vld [vmem:[#allocation5 + $0x260] sm:$0xff]
    %v403 = vld [vmem:[#allocation5 + $0x268] sm:$0xff]
    %v404 = vld [vmem:[#allocation5 + $0x270] sm:$0xff]
    %v405 = vld [vmem:[#allocation5 + $0x278] sm:$0xff]
    %v406 = vld [vmem:[#allocation5 + $0x280] sm:$0xff]
    %v407 = vld [vmem:[#allocation5 + $0x288] sm:$0xff]
    %v408 = vld [vmem:[#allocation5 + $0x290] sm:$0xff]
    %v409 = vld [vmem:[#allocation5 + $0x298] sm:$0xff]
    %v410 = vld [vmem:[#allocation5 + $0x2a0] sm:$0xff]
    %v411 = vld [vmem:[#allocation5 + $0x2a8] sm:$0xff]
    %v412 = vld [vmem:[#allocation5 + $0x2b0] sm:$0xff]
    %v413 = vld [vmem:[#allocation5 + $0x2b8] sm:$0xff]
    %v414 = vld [vmem:[#allocation5 + $0x2c0] sm:$0xff]
    %v415 = vld [vmem:[#allocation5 + $0x2c8] sm:$0xff]
    %v416 = vld [vmem:[#allocation5 + $0x2d0] sm:$0xff]
    %v417 = vld [vmem:[#allocation5 + $0x2d8] sm:$0xff]
    %v418 = vld [vmem:[#allocation5 + $0x2e0] sm:$0xff]
    %v419 = vld [vmem:[#allocation5 + $0x2e8] sm:$0xff]
    %v420 = vld [vmem:[#allocation5 + $0x2f0] sm:$0xff]
    %v421 = vld [vmem:[#allocation5 + $0x2f8] sm:$0xff]
    %v422 = vld [vmem:[#allocation5 + $0x300] sm:$0xff]
    %v423 = vld [vmem:[#allocation5 + $0x308] sm:$0xff]
    %v424 = vld [vmem:[#allocation5 + $0x310] sm:$0xff]
    %v425 = vld [vmem:[#allocation5 + $0x318] sm:$0xff]
    %v426 = vld [vmem:[#allocation5 + $0x320] sm:$0xff]
    %v427 = vld [vmem:[#allocation5 + $0x328] sm:$0xff]
    %v428 = vld [vmem:[#allocation5 + $0x330] sm:$0xff]
    %v429 = vld [vmem:[#allocation5 + $0x338] sm:$0xff]
    %v430 = vld [vmem:[#allocation5 + $0x340] sm:$0xff]
    %v431 = vld [vmem:[#allocation5 + $0x348] sm:$0xff]
    %v432 = vld [vmem:[#allocation5 + $0x350] sm:$0xff]
    %v433 = vld [vmem:[#allocation5 + $0x358] sm:$0xff]
    %v434 = vld [vmem:[#allocation5 + $0x360] sm:$0xff]
    %v435 = vld [vmem:[#allocation5 + $0x368] sm:$0xff]
    %v436 = vld [vmem:[#allocation5 + $0x370] sm:$0xff]
    %v437 = vld [vmem:[#allocation5 + $0x378] sm:$0xff]
    %v438 = vld [vmem:[#allocation5 + $0x380] sm:$0xff]
    %v439 = vld [vmem:[#allocation5 + $0x388] sm:$0xff]
    %v440 = vld [vmem:[#allocation5 + $0x390] sm:$0xff]
    %v441 = vld [vmem:[#allocation5 + $0x398] sm:$0xff]
    %v442 = vld [vmem:[#allocation5 + $0x3a0] sm:$0xff]
    %v443 = vld [vmem:[#allocation5 + $0x3a8] sm:$0xff]
    %v444 = vld [vmem:[#allocation5 + $0x3b0] sm:$0xff]
    %v445 = vld [vmem:[#allocation5 + $0x3b8] sm:$0xff]
    %v446 = vld [vmem:[#allocation5 + $0x3c0] sm:$0xff]
    %v447 = vld [vmem:[#allocation5 + $0x3c8] sm:$0xff]
    %v448 = vld [vmem:[#allocation5 + $0x3d0] sm:$0xff]
    %v449 = vld [vmem:[#allocation5 + $0x3d8] sm:$0xff]
    %v450 = vld [vmem:[#allocation5 + $0x3e0] sm:$0xff]
    %v451 = vld [vmem:[#allocation5 + $0x3e8] sm:$0xff]
    %v452 = vld [vmem:[#allocation5 + $0x3f0] sm:$0xff]
    %v453 = vld [vmem:[#allocation5 + $0x3f8] sm:$0xff]
    %v582 = vunpack.c.l.b16 %v326
    %v583 = vunpack.c.h.b16 %v326
    %v584 = vunpack.c.l.b16 %v327
    %v585 = vunpack.c.h.b16 %v327
    %v586 = vunpack.c.l.b16 %v328
    %v587 = vunpack.c.h.b16 %v328
    %v588 = vunpack.c.l.b16 %v329
    %v589 = vunpack.c.h.b16 %v329
    %v590 = vunpack.c.l.b16 %v330
    %v591 = vunpack.c.h.b16 %v330
    %v592 = vunpack.c.l.b16 %v331
    %v593 = vunpack.c.h.b16 %v331
    %v594 = vunpack.c.l.b16 %v332
    %v595 = vunpack.c.h.b16 %v332
    %v596 = vunpack.c.l.b16 %v333
    %v597 = vunpack.c.h.b16 %v333
    %v598 = vunpack.c.l.b16 %v334
    %v599 = vunpack.c.h.b16 %v334
    %v600 = vunpack.c.l.b16 %v335
    %v601 = vunpack.c.h.b16 %v335
    %v602 = vunpack.c.l.b16 %v336
    %v603 = vunpack.c.h.b16 %v336
    %v604 = vunpack.c.l.b16 %v337
    %v605 = vunpack.c.h.b16 %v337
    %v606 = vunpack.c.l.b16 %v338
    %v607 = vunpack.c.h.b16 %v338
    %v608 = vunpack.c.l.b16 %v339
    %v609 = vunpack.c.h.b16 %v339
    %v610 = vunpack.c.l.b16 %v340
    %v611 = vunpack.c.h.b16 %v340
    %v612 = vunpack.c.l.b16 %v341
    %v613 = vunpack.c.h.b16 %v341
    %v614 = vunpack.c.l.b16 %v342
    %v615 = vunpack.c.h.b16 %v342
    %v616 = vunpack.c.l.b16 %v343
    %v617 = vunpack.c.h.b16 %v343
    %v618 = vunpack.c.l.b16 %v344
    %v619 = vunpack.c.h.b16 %v344
    %v620 = vunpack.c.l.b16 %v345
    %v621 = vunpack.c.h.b16 %v345
    %v622 = vunpack.c.l.b16 %v346
    %v623 = vunpack.c.h.b16 %v346
    %v624 = vunpack.c.l.b16 %v347
    %v625 = vunpack.c.h.b16 %v347
    %v626 = vunpack.c.l.b16 %v348
    %v627 = vunpack.c.h.b16 %v348
    %v628 = vunpack.c.l.b16 %v349
    %v629 = vunpack.c.h.b16 %v349
    %v630 = vunpack.c.l.b16 %v350
    %v631 = vunpack.c.h.b16 %v350
    %v632 = vunpack.c.l.b16 %v351
    %v633 = vunpack.c.h.b16 %v351
    %v634 = vunpack.c.l.b16 %v352
    %v635 = vunpack.c.h.b16 %v352
    %v636 = vunpack.c.l.b16 %v353
    %v637 = vunpack.c.h.b16 %v353
    %v638 = vunpack.c.l.b16 %v354
    %v639 = vunpack.c.h.b16 %v354
    %v640 = vunpack.c.l.b16 %v355
    %v641 = vunpack.c.h.b16 %v355
    %v642 = vunpack.c.l.b16 %v356
    %v643 = vunpack.c.h.b16 %v356
    %v644 = vunpack.c.l.b16 %v357
    %v645 = vunpack.c.h.b16 %v357
    %v646 = vunpack.c.l.b16 %v358
    %v647 = vunpack.c.h.b16 %v358
    %v648 = vunpack.c.l.b16 %v359
    %v649 = vunpack.c.h.b16 %v359
    %v650 = vunpack.c.l.b16 %v360
    %v651 = vunpack.c.h.b16 %v360
    %v652 = vunpack.c.l.b16 %v361
    %v653 = vunpack.c.h.b16 %v361
    %v654 = vunpack.c.l.b16 %v362
    %v655 = vunpack.c.h.b16 %v362
    %v656 = vunpack.c.l.b16 %v363
    %v657 = vunpack.c.h.b16 %v363
    %v658 = vunpack.c.l.b16 %v364
    %v659 = vunpack.c.h.b16 %v364
    %v660 = vunpack.c.l.b16 %v365
    %v661 = vunpack.c.h.b16 %v365
    %v662 = vunpack.c.l.b16 %v366
    %v663 = vunpack.c.h.b16 %v366
    %v664 = vunpack.c.l.b16 %v367
    %v665 = vunpack.c.h.b16 %v367
    %v666 = vunpack.c.l.b16 %v368
    %v667 = vunpack.c.h.b16 %v368
    %v668 = vunpack.c.l.b16 %v369
    %v669 = vunpack.c.h.b16 %v369
    %v670 = vunpack.c.l.b16 %v370
    %v671 = vunpack.c.h.b16 %v370
    %v672 = vunpack.c.l.b16 %v371
    %v673 = vunpack.c.h.b16 %v371
    %v674 = vunpack.c.l.b16 %v372
    %v675 = vunpack.c.h.b16 %v372
    %v676 = vunpack.c.l.b16 %v373
    %v677 = vunpack.c.h.b16 %v373
    %v678 = vunpack.c.l.b16 %v374
    %v679 = vunpack.c.h.b16 %v374
    %v680 = vunpack.c.l.b16 %v375
    %v681 = vunpack.c.h.b16 %v375
    %v682 = vunpack.c.l.b16 %v376
    %v683 = vunpack.c.h.b16 %v376
    %v684 = vunpack.c.l.b16 %v377
    %v685 = vunpack.c.h.b16 %v377
    %v686 = vunpack.c.l.b16 %v378
    %v687 = vunpack.c.h.b16 %v378
    %v688 = vunpack.c.l.b16 %v379
    %v689 = vunpack.c.h.b16 %v379
    %v690 = vunpack.c.l.b16 %v380
    %v691 = vunpack.c.h.b16 %v380
    %v692 = vunpack.c.l.b16 %v381
    %v693 = vunpack.c.h.b16 %v381
    %v694 = vunpack.c.l.b16 %v382
    %v695 = vunpack.c.h.b16 %v382
    %v696 = vunpack.c.l.b16 %v383
    %v697 = vunpack.c.h.b16 %v383
    %v698 = vunpack.c.l.b16 %v384
    %v699 = vunpack.c.h.b16 %v384
    %v700 = vunpack.c.l.b16 %v385
    %v701 = vunpack.c.h.b16 %v385
    %v702 = vunpack.c.l.b16 %v386
    %v703 = vunpack.c.h.b16 %v386
    %v704 = vunpack.c.l.b16 %v387
    %v705 = vunpack.c.h.b16 %v387
    %v706 = vunpack.c.l.b16 %v388
    %v707 = vunpack.c.h.b16 %v388
    %v708 = vunpack.c.l.b16 %v389
    %v709 = vunpack.c.h.b16 %v389
    %v710 = vunpack.c.l.b16 %v390
    %v711 = vunpack.c.h.b16 %v390
    %v712 = vunpack.c.l.b16 %v391
    %v713 = vunpack.c.h.b16 %v391
    %v714 = vunpack.c.l.b16 %v392
    %v715 = vunpack.c.h.b16 %v392
    %v716 = vunpack.c.l.b16 %v393
    %v717 = vunpack.c.h.b16 %v393
    %v718 = vunpack.c.l.b16 %v394
    %v719 = vunpack.c.h.b16 %v394
    %v720 = vunpack.c.l.b16 %v395
    %v721 = vunpack.c.h.b16 %v395
    %v722 = vunpack.c.l.b16 %v396
    %v723 = vunpack.c.h.b16 %v396
    %v724 = vunpack.c.l.b16 %v397
    %v725 = vunpack.c.h.b16 %v397
    %v726 = vunpack.c.l.b16 %v398
    %v727 = vunpack.c.h.b16 %v398
    %v728 = vunpack.c.l.b16 %v399
    %v729 = vunpack.c.h.b16 %v399
    %v730 = vunpack.c.l.b16 %v400
    %v731 = vunpack.c.h.b16 %v400
    %v732 = vunpack.c.l.b16 %v401
    %v733 = vunpack.c.h.b16 %v401
    %v734 = vunpack.c.l.b16 %v402
    %v735 = vunpack.c.h.b16 %v402
    %v736 = vunpack.c.l.b16 %v403
    %v737 = vunpack.c.h.b16 %v403
    %v738 = vunpack.c.l.b16 %v404
    %v739 = vunpack.c.h.b16 %v404
    %v740 = vunpack.c.l.b16 %v405
    %v741 = vunpack.c.h.b16 %v405
    %v742 = vunpack.c.l.b16 %v406
    %v743 = vunpack.c.h.b16 %v406
    %v744 = vunpack.c.l.b16 %v407
    %v745 = vunpack.c.h.b16 %v407
    %v746 = vunpack.c.l.b16 %v408
    %v747 = vunpack.c.h.b16 %v408
    %v748 = vunpack.c.l.b16 %v409
    %v749 = vunpack.c.h.b16 %v409
    %v750 = vunpack.c.l.b16 %v410
    %v751 = vunpack.c.h.b16 %v410
    %v752 = vunpack.c.l.b16 %v411
    %v753 = vunpack.c.h.b16 %v411
    %v754 = vunpack.c.l.b16 %v412
    %v755 = vunpack.c.h.b16 %v412
    %v756 = vunpack.c.l.b16 %v413
    %v757 = vunpack.c.h.b16 %v413
    %v758 = vunpack.c.l.b16 %v414
    %v759 = vunpack.c.h.b16 %v414
    %v760 = vunpack.c.l.b16 %v415
    %v761 = vunpack.c.h.b16 %v415
    %v762 = vunpack.c.l.b16 %v416
    %v763 = vunpack.c.h.b16 %v416
    %v764 = vunpack.c.l.b16 %v417
    %v765 = vunpack.c.h.b16 %v417
    %v766 = vunpack.c.l.b16 %v418
    %v767 = vunpack.c.h.b16 %v418
    %v768 = vunpack.c.l.b16 %v419
    %v769 = vunpack.c.h.b16 %v419
    %v770 = vunpack.c.l.b16 %v420
    %v771 = vunpack.c.h.b16 %v420
    %v772 = vunpack.c.l.b16 %v421
    %v773 = vunpack.c.h.b16 %v421
    %v774 = vunpack.c.l.b16 %v422
    %v775 = vunpack.c.h.b16 %v422
    %v776 = vunpack.c.l.b16 %v423
    %v777 = vunpack.c.h.b16 %v423
    %v778 = vunpack.c.l.b16 %v424
    %v779 = vunpack.c.h.b16 %v424
    %v780 = vunpack.c.l.b16 %v425
    %v781 = vunpack.c.h.b16 %v425
    %v782 = vunpack.c.l.b16 %v426
    %v783 = vunpack.c.h.b16 %v426
    %v784 = vunpack.c.l.b16 %v427
    %v785 = vunpack.c.h.b16 %v427
    %v786 = vunpack.c.l.b16 %v428
    %v787 = vunpack.c.h.b16 %v428
    %v788 = vunpack.c.l.b16 %v429
    %v789 = vunpack.c.h.b16 %v429
    %v790 = vunpack.c.l.b16 %v430
    %v791 = vunpack.c.h.b16 %v430
    %v792 = vunpack.c.l.b16 %v431
    %v793 = vunpack.c.h.b16 %v431
    %v794 = vunpack.c.l.b16 %v432
    %v795 = vunpack.c.h.b16 %v432
    %v796 = vunpack.c.l.b16 %v433
    %v797 = vunpack.c.h.b16 %v433
    %v798 = vunpack.c.l.b16 %v434
    %v799 = vunpack.c.h.b16 %v434
    %v800 = vunpack.c.l.b16 %v435
    %v801 = vunpack.c.h.b16 %v435
    %v802 = vunpack.c.l.b16 %v436
    %v803 = vunpack.c.h.b16 %v436
    %v804 = vunpack.c.l.b16 %v437
    %v805 = vunpack.c.h.b16 %v437
    %v806 = vunpack.c.l.b16 %v438
    %v807 = vunpack.c.h.b16 %v438
    %v808 = vunpack.c.l.b16 %v439
    %v809 = vunpack.c.h.b16 %v439
    %v810 = vunpack.c.l.b16 %v440
    %v811 = vunpack.c.h.b16 %v440
    %v812 = vunpack.c.l.b16 %v441
    %v813 = vunpack.c.h.b16 %v441
    %v814 = vunpack.c.l.b16 %v442
    %v815 = vunpack.c.h.b16 %v442
    %v816 = vunpack.c.l.b16 %v443
    %v817 = vunpack.c.h.b16 %v443
    %v818 = vunpack.c.l.b16 %v444
    %v819 = vunpack.c.h.b16 %v444
    %v820 = vunpack.c.l.b16 %v445
    %v821 = vunpack.c.h.b16 %v445
    %v822 = vunpack.c.l.b16 %v446
    %v823 = vunpack.c.h.b16 %v446
    %v824 = vunpack.c.l.b16 %v447
    %v825 = vunpack.c.h.b16 %v447
    %v826 = vunpack.c.l.b16 %v448
    %v827 = vunpack.c.h.b16 %v448
    %v828 = vunpack.c.l.b16 %v449
    %v829 = vunpack.c.h.b16 %v449
    %v830 = vunpack.c.l.b16 %v450
    %v831 = vunpack.c.h.b16 %v450
    %v832 = vunpack.c.l.b16 %v451
    %v833 = vunpack.c.h.b16 %v451
    %v834 = vunpack.c.l.b16 %v452
    %v835 = vunpack.c.h.b16 %v452
    %v836 = vunpack.c.l.b16 %v453
    %v837 = vunpack.c.h.b16 %v453
    %v838 = vpack.c.b16 %v584, %v582
    %v839 = vpack.c.b16 %v585, %v583
    %v840 = vpack.c.b16 %v588, %v586
    %v841 = vpack.c.b16 %v589, %v587
    %v842 = vpack.c.b16 %v592, %v590
    %v843 = vpack.c.b16 %v593, %v591
    %v844 = vpack.c.b16 %v596, %v594
    %v845 = vpack.c.b16 %v597, %v595
    %v846 = vpack.c.b16 %v600, %v598
    %v847 = vpack.c.b16 %v601, %v599
    %v848 = vpack.c.b16 %v604, %v602
    %v849 = vpack.c.b16 %v605, %v603
    %v850 = vpack.c.b16 %v608, %v606
    %v851 = vpack.c.b16 %v609, %v607
    %v852 = vpack.c.b16 %v612, %v610
    %v853 = vpack.c.b16 %v613, %v611
    %v854 = vpack.c.b16 %v616, %v614
    %v855 = vpack.c.b16 %v617, %v615
    %v856 = vpack.c.b16 %v620, %v618
    %v857 = vpack.c.b16 %v621, %v619
    %v858 = vpack.c.b16 %v624, %v622
    %v859 = vpack.c.b16 %v625, %v623
    %v860 = vpack.c.b16 %v628, %v626
    %v861 = vpack.c.b16 %v629, %v627
    %v862 = vpack.c.b16 %v632, %v630
    %v863 = vpack.c.b16 %v633, %v631
    %v864 = vpack.c.b16 %v636, %v634
    %v865 = vpack.c.b16 %v637, %v635
    %v866 = vpack.c.b16 %v640, %v638
    %v867 = vpack.c.b16 %v641, %v639
    %v868 = vpack.c.b16 %v644, %v642
    %v869 = vpack.c.b16 %v645, %v643
    %v870 = vpack.c.b16 %v648, %v646
    %v871 = vpack.c.b16 %v649, %v647
    %v872 = vpack.c.b16 %v652, %v650
    %v873 = vpack.c.b16 %v653, %v651
    %v874 = vpack.c.b16 %v656, %v654
    %v875 = vpack.c.b16 %v657, %v655
    %v876 = vpack.c.b16 %v660, %v658
    %v877 = vpack.c.b16 %v661, %v659
    %v878 = vpack.c.b16 %v664, %v662
    %v879 = vpack.c.b16 %v665, %v663
    %v880 = vpack.c.b16 %v668, %v666
    %v881 = vpack.c.b16 %v669, %v667
    %v882 = vpack.c.b16 %v672, %v670
    %v883 = vpack.c.b16 %v673, %v671
    %v884 = vpack.c.b16 %v676, %v674
    %v885 = vpack.c.b16 %v677, %v675
    %v886 = vpack.c.b16 %v680, %v678
    %v887 = vpack.c.b16 %v681, %v679
    %v888 = vpack.c.b16 %v684, %v682
    %v889 = vpack.c.b16 %v685, %v683
    %v890 = vpack.c.b16 %v688, %v686
    %v891 = vpack.c.b16 %v689, %v687
    %v892 = vpack.c.b16 %v692, %v690
    %v893 = vpack.c.b16 %v693, %v691
    %v894 = vpack.c.b16 %v696, %v694
    %v895 = vpack.c.b16 %v697, %v695
    %v896 = vpack.c.b16 %v700, %v698
    %v897 = vpack.c.b16 %v701, %v699
    %v898 = vpack.c.b16 %v704, %v702
    %v899 = vpack.c.b16 %v705, %v703
    %v900 = vpack.c.b16 %v708, %v706
    %v901 = vpack.c.b16 %v709, %v707
    %v902 = vpack.c.b16 %v712, %v710
    %v903 = vpack.c.b16 %v713, %v711
    %v904 = vpack.c.b16 %v716, %v714
    %v905 = vpack.c.b16 %v717, %v715
    %v906 = vpack.c.b16 %v720, %v718
    %v907 = vpack.c.b16 %v721, %v719
    %v908 = vpack.c.b16 %v724, %v722
    %v909 = vpack.c.b16 %v725, %v723
    %v910 = vpack.c.b16 %v728, %v726
    %v911 = vpack.c.b16 %v729, %v727
    %v912 = vpack.c.b16 %v732, %v730
    %v913 = vpack.c.b16 %v733, %v731
    %v914 = vpack.c.b16 %v736, %v734
    %v915 = vpack.c.b16 %v737, %v735
    %v916 = vpack.c.b16 %v740, %v738
    %v917 = vpack.c.b16 %v741, %v739
    %v918 = vpack.c.b16 %v744, %v742
    %v919 = vpack.c.b16 %v745, %v743
    %v920 = vpack.c.b16 %v748, %v746
    %v921 = vpack.c.b16 %v749, %v747
    %v922 = vpack.c.b16 %v752, %v750
    %v923 = vpack.c.b16 %v753, %v751
    %v924 = vpack.c.b16 %v756, %v754
    %v925 = vpack.c.b16 %v757, %v755
    %v926 = vpack.c.b16 %v760, %v758
    %v927 = vpack.c.b16 %v761, %v759
    %v928 = vpack.c.b16 %v764, %v762
    %v929 = vpack.c.b16 %v765, %v763
    %v930 = vpack.c.b16 %v768, %v766
    %v931 = vpack.c.b16 %v769, %v767
    %v932 = vpack.c.b16 %v772, %v770
    %v933 = vpack.c.b16 %v773, %v771
    %v934 = vpack.c.b16 %v776, %v774
    %v935 = vpack.c.b16 %v777, %v775
    %v936 = vpack.c.b16 %v780, %v778
    %v937 = vpack.c.b16 %v781, %v779
    %v938 = vpack.c.b16 %v784, %v782
    %v939 = vpack.c.b16 %v785, %v783
    %v940 = vpack.c.b16 %v788, %v786
    %v941 = vpack.c.b16 %v789, %v787
    %v942 = vpack.c.b16 %v792, %v790
    %v943 = vpack.c.b16 %v793, %v791
    %v944 = vpack.c.b16 %v796, %v794
    %v945 = vpack.c.b16 %v797, %v795
    %v946 = vpack.c.b16 %v800, %v798
    %v947 = vpack.c.b16 %v801, %v799
    %v948 = vpack.c.b16 %v804, %v802
    %v949 = vpack.c.b16 %v805, %v803
    %v950 = vpack.c.b16 %v808, %v806
    %v951 = vpack.c.b16 %v809, %v807
    %v952 = vpack.c.b16 %v812, %v810
    %v953 = vpack.c.b16 %v813, %v811
    %v954 = vpack.c.b16 %v816, %v814
    %v955 = vpack.c.b16 %v817, %v815
    %v956 = vpack.c.b16 %v820, %v818
    %v957 = vpack.c.b16 %v821, %v819
    %v958 = vpack.c.b16 %v824, %v822
    %v959 = vpack.c.b16 %v825, %v823
    %v960 = vpack.c.b16 %v828, %v826
    %v961 = vpack.c.b16 %v829, %v827
    %v962 = vpack.c.b16 %v832, %v830
    %v963 = vpack.c.b16 %v833, %v831
    %v964 = vpack.c.b16 %v836, %v834
    %v965 = vpack.c.b16 %v837, %v835
    %1094 = vmatpush.bf16.msra.mxu0 %v852
    %1095 = vmatpush.bf16.msra.mxu0 %v850
    %1096 = vmatpush.bf16.msra.mxu0 %v848
    %1097 = vmatpush.bf16.msra.mxu0 %v846
    %1098 = vmatpush.bf16.msra.mxu0 %v844
    %1099 = vmatpush.bf16.msra.mxu0 %v842
    %1100 = vmatpush.bf16.msra.mxu0 %v840
    %1101 = vmatpush.bf16.msra.mxu0 %v838
    %1102 = vmatmul.bf16.gmra.mxu0 %v262
    %v1103 = vpop.f32.mrf.mxu0
    %v1104 = vadd.f32 0.0, %v1103
    %v1105 = vpop.f32.mrf.mxu0
    %v1106 = vadd.f32 0.0, %v1105
    %1107 = vmatmul.bf16.gmra.mxu0 %v270
    %v1108 = vpop.f32.mrf.mxu0
    %v1109 = vadd.f32 0.0, %v1108
    %v1110 = vpop.f32.mrf.mxu0
    %v1111 = vadd.f32 0.0, %v1110
    %1112 = vmatmul.bf16.gmra.mxu0 %v278
    %v1113 = vpop.f32.mrf.mxu0
    %v1114 = vadd.f32 0.0, %v1113
    %v1115 = vpop.f32.mrf.mxu0
    %v1116 = vadd.f32 0.0, %v1115
    %1117 = vmatmul.bf16.gmra.mxu0 %v286
    %v1118 = vpop.f32.mrf.mxu0
    %v1119 = vadd.f32 0.0, %v1118
    %v1120 = vpop.f32.mrf.mxu0
    %v1121 = vadd.f32 0.0, %v1120
    %1122 = vmatmul.bf16.gmra.mxu0 %v294
    %v1123 = vpop.f32.mrf.mxu0
    %v1124 = vadd.f32 0.0, %v1123
    %v1125 = vpop.f32.mrf.mxu0
    %v1126 = vadd.f32 0.0, %v1125
    %1127 = vmatmul.bf16.gmra.mxu0 %v302
    %v1128 = vpop.f32.mrf.mxu0
    %v1129 = vadd.f32 0.0, %v1128
    %v1130 = vpop.f32.mrf.mxu0
    %v1131 = vadd.f32 0.0, %v1130
    %1132 = vmatmul.bf16.gmra.mxu0 %v310
    %v1133 = vpop.f32.mrf.mxu0
    %v1134 = vadd.f32 0.0, %v1133
    %v1135 = vpop.f32.mrf.mxu0
    %v1136 = vadd.f32 0.0, %v1135
    %1137 = vmatmul.bf16.gmra.mxu0 %v318
    %v1138 = vpop.f32.mrf.mxu0
    %v1139 = vadd.f32 0.0, %v1138
    %v1140 = vpop.f32.mrf.mxu0
    %v1141 = vadd.f32 0.0, %v1140
    %1142 = vdwg.mxu0
    %1143 = vmatpush.bf16.msra.mxu0 %v868
    %1144 = vmatpush.bf16.msra.mxu0 %v866
    %1145 = vmatpush.bf16.msra.mxu0 %v864
    %1146 = vmatpush.bf16.msra.mxu0 %v862
    %1147 = vmatpush.bf16.msra.mxu0 %v860
    %1148 = vmatpush.bf16.msra.mxu0 %v858
    %1149 = vmatpush.bf16.msra.mxu0 %v856
    %1150 = vmatpush.bf16.msra.mxu0 %v854
    %1151 = vmatmul.bf16.gmra.mxu0 %v263
    %v1152 = vpop.f32.mrf.mxu0
    %v1153 = vadd.f32 %v1104, %v1152
    %v1154 = vpop.f32.mrf.mxu0
    %v1155 = vadd.f32 %v1106, %v1154
    %1156 = vmatmul.bf16.gmra.mxu0 %v271
    %v1157 = vpop.f32.mrf.mxu0
    %v1158 = vadd.f32 %v1109, %v1157
    %v1159 = vpop.f32.mrf.mxu0
    %v1160 = vadd.f32 %v1111, %v1159
    %1161 = vmatmul.bf16.gmra.mxu0 %v279
    %v1162 = vpop.f32.mrf.mxu0
    %v1163 = vadd.f32 %v1114, %v1162
    %v1164 = vpop.f32.mrf.mxu0
    %v1165 = vadd.f32 %v1116, %v1164
    %1166 = vmatmul.bf16.gmra.mxu0 %v287
    %v1167 = vpop.f32.mrf.mxu0
    %v1168 = vadd.f32 %v1119, %v1167
    %v1169 = vpop.f32.mrf.mxu0
    %v1170 = vadd.f32 %v1121, %v1169
    %1171 = vmatmul.bf16.gmra.mxu0 %v295
    %v1172 = vpop.f32.mrf.mxu0
    %v1173 = vadd.f32 %v1124, %v1172
    %v1174 = vpop.f32.mrf.mxu0
    %v1175 = vadd.f32 %v1126, %v1174
    %1176 = vmatmul.bf16.gmra.mxu0 %v303
    %v1177 = vpop.f32.mrf.mxu0
    %v1178 = vadd.f32 %v1129, %v1177
    %v1179 = vpop.f32.mrf.mxu0
    %v1180 = vadd.f32 %v1131, %v1179
    %1181 = vmatmul.bf16.gmra.mxu0 %v311
    %v1182 = vpop.f32.mrf.mxu0
    %v1183 = vadd.f32 %v1134, %v1182
    %v1184 = vpop.f32.mrf.mxu0
    %v1185 = vadd.f32 %v1136, %v1184
    %1186 = vmatmul.bf16.gmra.mxu0 %v319
    %v1187 = vpop.f32.mrf.mxu0
    %v1188 = vadd.f32 %v1139, %v1187
    %v1189 = vpop.f32.mrf.mxu0
    %v1190 = vadd.f32 %v1141, %v1189
    %1191 = vdwg.mxu0
    %1192 = vmatpush.bf16.msra.mxu0 %v884
    %1193 = vmatpush.bf16.msra.mxu0 %v882
    %1194 = vmatpush.bf16.msra.mxu0 %v880
    %1195 = vmatpush.bf16.msra.mxu0 %v878
    %1196 = vmatpush.bf16.msra.mxu0 %v876
    %1197 = vmatpush.bf16.msra.mxu0 %v874
    %1198 = vmatpush.bf16.msra.mxu0 %v872
    %1199 = vmatpush.bf16.msra.mxu0 %v870
    %1200 = vmatmul.bf16.gmra.mxu0 %v264
    %v1201 = vpop.f32.mrf.mxu0
    %v1202 = vadd.f32 %v1153, %v1201
    %v1203 = vpop.f32.mrf.mxu0
    %v1204 = vadd.f32 %v1155, %v1203
    %1205 = vmatmul.bf16.gmra.mxu0 %v272
    %v1206 = vpop.f32.mrf.mxu0
    %v1207 = vadd.f32 %v1158, %v1206
    %v1208 = vpop.f32.mrf.mxu0
    %v1209 = vadd.f32 %v1160, %v1208
    %1210 = vmatmul.bf16.gmra.mxu0 %v280
    %v1211 = vpop.f32.mrf.mxu0
    %v1212 = vadd.f32 %v1163, %v1211
    %v1213 = vpop.f32.mrf.mxu0
    %v1214 = vadd.f32 %v1165, %v1213
    %1215 = vmatmul.bf16.gmra.mxu0 %v288
    %v1216 = vpop.f32.mrf.mxu0
    %v1217 = vadd.f32 %v1168, %v1216
    %v1218 = vpop.f32.mrf.mxu0
    %v1219 = vadd.f32 %v1170, %v1218
    %1220 = vmatmul.bf16.gmra.mxu0 %v296
    %v1221 = vpop.f32.mrf.mxu0
    %v1222 = vadd.f32 %v1173, %v1221
    %v1223 = vpop.f32.mrf.mxu0
    %v1224 = vadd.f32 %v1175, %v1223
    %1225 = vmatmul.bf16.gmra.mxu0 %v304
    %v1226 = vpop.f32.mrf.mxu0
    %v1227 = vadd.f32 %v1178, %v1226
    %v1228 = vpop.f32.mrf.mxu0
    %v1229 = vadd.f32 %v1180, %v1228
    %1230 = vmatmul.bf16.gmra.mxu0 %v312
    %v1231 = vpop.f32.mrf.mxu0
    %v1232 = vadd.f32 %v1183, %v1231
    %v1233 = vpop.f32.mrf.mxu0
    %v1234 = vadd.f32 %v1185, %v1233
    %1235 = vmatmul.bf16.gmra.mxu0 %v320
    %v1236 = vpop.f32.mrf.mxu0
    %v1237 = vadd.f32 %v1188, %v1236
    %v1238 = vpop.f32.mrf.mxu0
    %v1239 = vadd.f32 %v1190, %v1238
    %1240 = vdwg.mxu0
    %1241 = vmatpush.bf16.msra.mxu0 %v900
    %1242 = vmatpush.bf16.msra.mxu0 %v898
    %1243 = vmatpush.bf16.msra.mxu0 %v896
    %1244 = vmatpush.bf16.msra.mxu0 %v894
    %1245 = vmatpush.bf16.msra.mxu0 %v892
    %1246 = vmatpush.bf16.msra.mxu0 %v890
    %1247 = vmatpush.bf16.msra.mxu0 %v888
    %1248 = vmatpush.bf16.msra.mxu0 %v886
    %1249 = vmatmul.bf16.gmra.mxu0 %v265
    %v1250 = vpop.f32.mrf.mxu0
    %v1251 = vadd.f32 %v1202, %v1250
    %v1252 = vpop.f32.mrf.mxu0
    %v1253 = vadd.f32 %v1204, %v1252
    %1254 = vmatmul.bf16.gmra.mxu0 %v273
    %v1255 = vpop.f32.mrf.mxu0
    %v1256 = vadd.f32 %v1207, %v1255
    %v1257 = vpop.f32.mrf.mxu0
    %v1258 = vadd.f32 %v1209, %v1257
    %1259 = vmatmul.bf16.gmra.mxu0 %v281
    %v1260 = vpop.f32.mrf.mxu0
    %v1261 = vadd.f32 %v1212, %v1260
    %v1262 = vpop.f32.mrf.mxu0
    %v1263 = vadd.f32 %v1214, %v1262
    %1264 = vmatmul.bf16.gmra.mxu0 %v289
    %v1265 = vpop.f32.mrf.mxu0
    %v1266 = vadd.f32 %v1217, %v1265
    %v1267 = vpop.f32.mrf.mxu0
    %v1268 = vadd.f32 %v1219, %v1267
    %1269 = vmatmul.bf16.gmra.mxu0 %v297
    %v1270 = vpop.f32.mrf.mxu0
    %v1271 = vadd.f32 %v1222, %v1270
    %v1272 = vpop.f32.mrf.mxu0
    %v1273 = vadd.f32 %v1224, %v1272
    %1274 = vmatmul.bf16.gmra.mxu0 %v305
    %v1275 = vpop.f32.mrf.mxu0
    %v1276 = vadd.f32 %v1227, %v1275
    %v1277 = vpop.f32.mrf.mxu0
    %v1278 = vadd.f32 %v1229, %v1277
    %1279 = vmatmul.bf16.gmra.mxu0 %v313
    %v1280 = vpop.f32.mrf.mxu0
    %v1281 = vadd.f32 %v1232, %v1280
    %v1282 = vpop.f32.mrf.mxu0
    %v1283 = vadd.f32 %v1234, %v1282
    %1284 = vmatmul.bf16.gmra.mxu0 %v321
    %v1285 = vpop.f32.mrf.mxu0
    %v1286 = vadd.f32 %v1237, %v1285
    %v1287 = vpop.f32.mrf.mxu0
    %v1288 = vadd.f32 %v1239, %v1287
    %1289 = vdwg.mxu0
    %1290 = vmatpush.bf16.msra.mxu0 %v916
    %1291 = vmatpush.bf16.msra.mxu0 %v914
    %1292 = vmatpush.bf16.msra.mxu0 %v912
    %1293 = vmatpush.bf16.msra.mxu0 %v910
    %1294 = vmatpush.bf16.msra.mxu0 %v908
    %1295 = vmatpush.bf16.msra.mxu0 %v906
    %1296 = vmatpush.bf16.msra.mxu0 %v904
    %1297 = vmatpush.bf16.msra.mxu0 %v902
    %1298 = vmatmul.bf16.gmra.mxu0 %v266
    %v1299 = vpop.f32.mrf.mxu0
    %v1300 = vadd.f32 %v1251, %v1299
    %v1301 = vpop.f32.mrf.mxu0
    %v1302 = vadd.f32 %v1253, %v1301
    %1303 = vmatmul.bf16.gmra.mxu0 %v274
    %v1304 = vpop.f32.mrf.mxu0
    %v1305 = vadd.f32 %v1256, %v1304
    %v1306 = vpop.f32.mrf.mxu0
    %v1307 = vadd.f32 %v1258, %v1306
    %1308 = vmatmul.bf16.gmra.mxu0 %v282
    %v1309 = vpop.f32.mrf.mxu0
    %v1310 = vadd.f32 %v1261, %v1309
    %v1311 = vpop.f32.mrf.mxu0
    %v1312 = vadd.f32 %v1263, %v1311
    %1313 = vmatmul.bf16.gmra.mxu0 %v290
    %v1314 = vpop.f32.mrf.mxu0
    %v1315 = vadd.f32 %v1266, %v1314
    %v1316 = vpop.f32.mrf.mxu0
    %v1317 = vadd.f32 %v1268, %v1316
    %1318 = vmatmul.bf16.gmra.mxu0 %v298
    %v1319 = vpop.f32.mrf.mxu0
    %v1320 = vadd.f32 %v1271, %v1319
    %v1321 = vpop.f32.mrf.mxu0
    %v1322 = vadd.f32 %v1273, %v1321
    %1323 = vmatmul.bf16.gmra.mxu0 %v306
    %v1324 = vpop.f32.mrf.mxu0
    %v1325 = vadd.f32 %v1276, %v1324
    %v1326 = vpop.f32.mrf.mxu0
    %v1327 = vadd.f32 %v1278, %v1326
    %1328 = vmatmul.bf16.gmra.mxu0 %v314
    %v1329 = vpop.f32.mrf.mxu0
    %v1330 = vadd.f32 %v1281, %v1329
    %v1331 = vpop.f32.mrf.mxu0
    %v1332 = vadd.f32 %v1283, %v1331
    %1333 = vmatmul.bf16.gmra.mxu0 %v322
    %v1334 = vpop.f32.mrf.mxu0
    %v1335 = vadd.f32 %v1286, %v1334
    %v1336 = vpop.f32.mrf.mxu0
    %v1337 = vadd.f32 %v1288, %v1336
    %1338 = vdwg.mxu0
    %1339 = vmatpush.bf16.msra.mxu0 %v932
    %1340 = vmatpush.bf16.msra.mxu0 %v930
    %1341 = vmatpush.bf16.msra.mxu0 %v928
    %1342 = vmatpush.bf16.msra.mxu0 %v926
    %1343 = vmatpush.bf16.msra.mxu0 %v924
    %1344 = vmatpush.bf16.msra.mxu0 %v922
    %1345 = vmatpush.bf16.msra.mxu0 %v920
    %1346 = vmatpush.bf16.msra.mxu0 %v918
    %1347 = vmatmul.bf16.gmra.mxu0 %v267
    %v1348 = vpop.f32.mrf.mxu0
    %v1349 = vadd.f32 %v1300, %v1348
    %v1350 = vpop.f32.mrf.mxu0
    %v1351 = vadd.f32 %v1302, %v1350
    %1352 = vmatmul.bf16.gmra.mxu0 %v275
    %v1353 = vpop.f32.mrf.mxu0
    %v1354 = vadd.f32 %v1305, %v1353
    %v1355 = vpop.f32.mrf.mxu0
    %v1356 = vadd.f32 %v1307, %v1355
    %1357 = vmatmul.bf16.gmra.mxu0 %v283
    %v1358 = vpop.f32.mrf.mxu0
    %v1359 = vadd.f32 %v1310, %v1358
    %v1360 = vpop.f32.mrf.mxu0
    %v1361 = vadd.f32 %v1312, %v1360
    %1362 = vmatmul.bf16.gmra.mxu0 %v291
    %v1363 = vpop.f32.mrf.mxu0
    %v1364 = vadd.f32 %v1315, %v1363
    %v1365 = vpop.f32.mrf.mxu0
    %v1366 = vadd.f32 %v1317, %v1365
    %1367 = vmatmul.bf16.gmra.mxu0 %v299
    %v1368 = vpop.f32.mrf.mxu0
    %v1369 = vadd.f32 %v1320, %v1368
    %v1370 = vpop.f32.mrf.mxu0
    %v1371 = vadd.f32 %v1322, %v1370
    %1372 = vmatmul.bf16.gmra.mxu0 %v307
    %v1373 = vpop.f32.mrf.mxu0
    %v1374 = vadd.f32 %v1325, %v1373
    %v1375 = vpop.f32.mrf.mxu0
    %v1376 = vadd.f32 %v1327, %v1375
    %1377 = vmatmul.bf16.gmra.mxu0 %v315
    %v1378 = vpop.f32.mrf.mxu0
    %v1379 = vadd.f32 %v1330, %v1378
    %v1380 = vpop.f32.mrf.mxu0
    %v1381 = vadd.f32 %v1332, %v1380
    %1382 = vmatmul.bf16.gmra.mxu0 %v323
    %v1383 = vpop.f32.mrf.mxu0
    %v1384 = vadd.f32 %v1335, %v1383
    %v1385 = vpop.f32.mrf.mxu0
    %v1386 = vadd.f32 %v1337, %v1385
    %1387 = vdwg.mxu0
    %1388 = vmatpush.bf16.msra.mxu0 %v948
    %1389 = vmatpush.bf16.msra.mxu0 %v946
    %1390 = vmatpush.bf16.msra.mxu0 %v944
    %1391 = vmatpush.bf16.msra.mxu0 %v942
    %1392 = vmatpush.bf16.msra.mxu0 %v940
    %1393 = vmatpush.bf16.msra.mxu0 %v938
    %1394 = vmatpush.bf16.msra.mxu0 %v936
    %1395 = vmatpush.bf16.msra.mxu0 %v934
    %1396 = vmatmul.bf16.gmra.mxu0 %v268
    %v1397 = vpop.f32.mrf.mxu0
    %v1398 = vadd.f32 %v1349, %v1397
    %v1399 = vpop.f32.mrf.mxu0
    %v1400 = vadd.f32 %v1351, %v1399
    %1401 = vmatmul.bf16.gmra.mxu0 %v276
    %v1402 = vpop.f32.mrf.mxu0
    %v1403 = vadd.f32 %v1354, %v1402
    %v1404 = vpop.f32.mrf.mxu0
    %v1405 = vadd.f32 %v1356, %v1404
    %1406 = vmatmul.bf16.gmra.mxu0 %v284
    %v1407 = vpop.f32.mrf.mxu0
    %v1408 = vadd.f32 %v1359, %v1407
    %v1409 = vpop.f32.mrf.mxu0
    %v1410 = vadd.f32 %v1361, %v1409
    %1411 = vmatmul.bf16.gmra.mxu0 %v292
    %v1412 = vpop.f32.mrf.mxu0
    %v1413 = vadd.f32 %v1364, %v1412
    %v1414 = vpop.f32.mrf.mxu0
    %v1415 = vadd.f32 %v1366, %v1414
    %1416 = vmatmul.bf16.gmra.mxu0 %v300
    %v1417 = vpop.f32.mrf.mxu0
    %v1418 = vadd.f32 %v1369, %v1417
    %v1419 = vpop.f32.mrf.mxu0
    %v1420 = vadd.f32 %v1371, %v1419
    %1421 = vmatmul.bf16.gmra.mxu0 %v308
    %v1422 = vpop.f32.mrf.mxu0
    %v1423 = vadd.f32 %v1374, %v1422
    %v1424 = vpop.f32.mrf.mxu0
    %v1425 = vadd.f32 %v1376, %v1424
    %1426 = vmatmul.bf16.gmra.mxu0 %v316
    %v1427 = vpop.f32.mrf.mxu0
    %v1428 = vadd.f32 %v1379, %v1427
    %v1429 = vpop.f32.mrf.mxu0
    %v1430 = vadd.f32 %v1381, %v1429
    %1431 = vmatmul.bf16.gmra.mxu0 %v324
    %v1432 = vpop.f32.mrf.mxu0
    %v1433 = vadd.f32 %v1384, %v1432
    %v1434 = vpop.f32.mrf.mxu0
    %v1435 = vadd.f32 %v1386, %v1434
    %1436 = vdwg.mxu0
    %1437 = vmatpush.bf16.msra.mxu0 %v964
    %1438 = vmatpush.bf16.msra.mxu0 %v962
    %1439 = vmatpush.bf16.msra.mxu0 %v960
    %1440 = vmatpush.bf16.msra.mxu0 %v958
    %1441 = vmatpush.bf16.msra.mxu0 %v956
    %1442 = vmatpush.bf16.msra.mxu0 %v954
    %1443 = vmatpush.bf16.msra.mxu0 %v952
    %1444 = vmatpush.bf16.msra.mxu0 %v950
    %1445 = vmatmul.bf16.gmra.mxu0 %v269
    %v1446 = vpop.f32.mrf.mxu0
    %v1447 = vadd.f32 %v1398, %v1446
    %v1448 = vpop.f32.mrf.mxu0
    %v1449 = vadd.f32 %v1400, %v1448
    %1450 = vmatmul.bf16.gmra.mxu0 %v277
    %v1451 = vpop.f32.mrf.mxu0
    %v1452 = vadd.f32 %v1403, %v1451
    %v1453 = vpop.f32.mrf.mxu0
    %v1454 = vadd.f32 %v1405, %v1453
    %1455 = vmatmul.bf16.gmra.mxu0 %v285
    %v1456 = vpop.f32.mrf.mxu0
    %v1457 = vadd.f32 %v1408, %v1456
    %v1458 = vpop.f32.mrf.mxu0
    %v1459 = vadd.f32 %v1410, %v1458
    %1460 = vmatmul.bf16.gmra.mxu0 %v293
    %v1461 = vpop.f32.mrf.mxu0
    %v1462 = vadd.f32 %v1413, %v1461
    %v1463 = vpop.f32.mrf.mxu0
    %v1464 = vadd.f32 %v1415, %v1463
    %1465 = vmatmul.bf16.gmra.mxu0 %v301
    %v1466 = vpop.f32.mrf.mxu0
    %v1467 = vadd.f32 %v1418, %v1466
    %v1468 = vpop.f32.mrf.mxu0
    %v1469 = vadd.f32 %v1420, %v1468
    %1470 = vmatmul.bf16.gmra.mxu0 %v309
    %v1471 = vpop.f32.mrf.mxu0
    %v1472 = vadd.f32 %v1423, %v1471
    %v1473 = vpop.f32.mrf.mxu0
    %v1474 = vadd.f32 %v1425, %v1473
    %1475 = vmatmul.bf16.gmra.mxu0 %v317
    %v1476 = vpop.f32.mrf.mxu0
    %v1477 = vadd.f32 %v1428, %v1476
    %v1478 = vpop.f32.mrf.mxu0
    %v1479 = vadd.f32 %v1430, %v1478
    %1480 = vmatmul.bf16.gmra.mxu0 %v325
    %v1481 = vpop.f32.mrf.mxu0
    %v1482 = vadd.f32 %v1433, %v1481
    %v1483 = vpop.f32.mrf.mxu0
    %v1484 = vadd.f32 %v1435, %v1483
    %1485 = vdwg.mxu0
    %1486 = vmatpush.bf16.msra.mxu0 %v853
    %1487 = vmatpush.bf16.msra.mxu0 %v851
    %1488 = vmatpush.bf16.msra.mxu0 %v849
    %1489 = vmatpush.bf16.msra.mxu0 %v847
    %1490 = vmatpush.bf16.msra.mxu0 %v845
    %1491 = vmatpush.bf16.msra.mxu0 %v843
    %1492 = vmatpush.bf16.msra.mxu0 %v841
    %1493 = vmatpush.bf16.msra.mxu0 %v839
    %1494 = vmatmul.bf16.gmra.mxu0 %v262
    %v1495 = vpop.f32.mrf.mxu0
    %v1496 = vadd.f32 0.0, %v1495
    %v1497 = vpop.f32.mrf.mxu0
    %v1498 = vadd.f32 0.0, %v1497
    %1499 = vmatmul.bf16.gmra.mxu0 %v270
    %v1500 = vpop.f32.mrf.mxu0
    %v1501 = vadd.f32 0.0, %v1500
    %v1502 = vpop.f32.mrf.mxu0
    %v1503 = vadd.f32 0.0, %v1502
    %1504 = vmatmul.bf16.gmra.mxu0 %v278
    %v1505 = vpop.f32.mrf.mxu0
    %v1506 = vadd.f32 0.0, %v1505
    %v1507 = vpop.f32.mrf.mxu0
    %v1508 = vadd.f32 0.0, %v1507
    %1509 = vmatmul.bf16.gmra.mxu0 %v286
    %v1510 = vpop.f32.mrf.mxu0
    %v1511 = vadd.f32 0.0, %v1510
    %v1512 = vpop.f32.mrf.mxu0
    %v1513 = vadd.f32 0.0, %v1512
    %1514 = vmatmul.bf16.gmra.mxu0 %v294
    %v1515 = vpop.f32.mrf.mxu0
    %v1516 = vadd.f32 0.0, %v1515
    %v1517 = vpop.f32.mrf.mxu0
    %v1518 = vadd.f32 0.0, %v1517
    %1519 = vmatmul.bf16.gmra.mxu0 %v302
    %v1520 = vpop.f32.mrf.mxu0
    %v1521 = vadd.f32 0.0, %v1520
    %v1522 = vpop.f32.mrf.mxu0
    %v1523 = vadd.f32 0.0, %v1522
    %1524 = vmatmul.bf16.gmra.mxu0 %v310
    %v1525 = vpop.f32.mrf.mxu0
    %v1526 = vadd.f32 0.0, %v1525
    %v1527 = vpop.f32.mrf.mxu0
    %v1528 = vadd.f32 0.0, %v1527
    %1529 = vmatmul.bf16.gmra.mxu0 %v318
    %v1530 = vpop.f32.mrf.mxu0
    %v1531 = vadd.f32 0.0, %v1530
    %v1532 = vpop.f32.mrf.mxu0
    %v1533 = vadd.f32 0.0, %v1532
    %1534 = vdwg.mxu0
    %1535 = vmatpush.bf16.msra.mxu0 %v869
    %1536 = vmatpush.bf16.msra.mxu0 %v867
    %1537 = vmatpush.bf16.msra.mxu0 %v865
    %1538 = vmatpush.bf16.msra.mxu0 %v863
    %1539 = vmatpush.bf16.msra.mxu0 %v861
    %1540 = vmatpush.bf16.msra.mxu0 %v859
    %1541 = vmatpush.bf16.msra.mxu0 %v857
    %1542 = vmatpush.bf16.msra.mxu0 %v855
    %1543 = vmatmul.bf16.gmra.mxu0 %v263
    %v1544 = vpop.f32.mrf.mxu0
    %v1545 = vadd.f32 %v1496, %v1544
    %v1546 = vpop.f32.mrf.mxu0
    %v1547 = vadd.f32 %v1498, %v1546
    %1548 = vmatmul.bf16.gmra.mxu0 %v271
    %v1549 = vpop.f32.mrf.mxu0
    %v1550 = vadd.f32 %v1501, %v1549
    %v1551 = vpop.f32.mrf.mxu0
    %v1552 = vadd.f32 %v1503, %v1551
    %1553 = vmatmul.bf16.gmra.mxu0 %v279
    %v1554 = vpop.f32.mrf.mxu0
    %v1555 = vadd.f32 %v1506, %v1554
    %v1556 = vpop.f32.mrf.mxu0
    %v1557 = vadd.f32 %v1508, %v1556
    %1558 = vmatmul.bf16.gmra.mxu0 %v287
    %v1559 = vpop.f32.mrf.mxu0
    %v1560 = vadd.f32 %v1511, %v1559
    %v1561 = vpop.f32.mrf.mxu0
    %v1562 = vadd.f32 %v1513, %v1561
    %1563 = vmatmul.bf16.gmra.mxu0 %v295
    %v1564 = vpop.f32.mrf.mxu0
    %v1565 = vadd.f32 %v1516, %v1564
    %v1566 = vpop.f32.mrf.mxu0
    %v1567 = vadd.f32 %v1518, %v1566
    %1568 = vmatmul.bf16.gmra.mxu0 %v303
    %v1569 = vpop.f32.mrf.mxu0
    %v1570 = vadd.f32 %v1521, %v1569
    %v1571 = vpop.f32.mrf.mxu0
    %v1572 = vadd.f32 %v1523, %v1571
    %1573 = vmatmul.bf16.gmra.mxu0 %v311
    %v1574 = vpop.f32.mrf.mxu0
    %v1575 = vadd.f32 %v1526, %v1574
    %v1576 = vpop.f32.mrf.mxu0
    %v1577 = vadd.f32 %v1528, %v1576
    %1578 = vmatmul.bf16.gmra.mxu0 %v319
    %v1579 = vpop.f32.mrf.mxu0
    %v1580 = vadd.f32 %v1531, %v1579
    %v1581 = vpop.f32.mrf.mxu0
    %v1582 = vadd.f32 %v1533, %v1581
    %1583 = vdwg.mxu0
    %1584 = vmatpush.bf16.msra.mxu0 %v885
    %1585 = vmatpush.bf16.msra.mxu0 %v883
    %1586 = vmatpush.bf16.msra.mxu0 %v881
    %1587 = vmatpush.bf16.msra.mxu0 %v879
    %1588 = vmatpush.bf16.msra.mxu0 %v877
    %1589 = vmatpush.bf16.msra.mxu0 %v875
    %1590 = vmatpush.bf16.msra.mxu0 %v873
    %1591 = vmatpush.bf16.msra.mxu0 %v871
    %1592 = vmatmul.bf16.gmra.mxu0 %v264
    %v1593 = vpop.f32.mrf.mxu0
    %v1594 = vadd.f32 %v1545, %v1593
    %v1595 = vpop.f32.mrf.mxu0
    %v1596 = vadd.f32 %v1547, %v1595
    %1597 = vmatmul.bf16.gmra.mxu0 %v272
    %v1598 = vpop.f32.mrf.mxu0
    %v1599 = vadd.f32 %v1550, %v1598
    %v1600 = vpop.f32.mrf.mxu0
    %v1601 = vadd.f32 %v1552, %v1600
    %1602 = vmatmul.bf16.gmra.mxu0 %v280
    %v1603 = vpop.f32.mrf.mxu0
    %v1604 = vadd.f32 %v1555, %v1603
    %v1605 = vpop.f32.mrf.mxu0
    %v1606 = vadd.f32 %v1557, %v1605
    %1607 = vmatmul.bf16.gmra.mxu0 %v288
    %v1608 = vpop.f32.mrf.mxu0
    %v1609 = vadd.f32 %v1560, %v1608
    %v1610 = vpop.f32.mrf.mxu0
    %v1611 = vadd.f32 %v1562, %v1610
    %1612 = vmatmul.bf16.gmra.mxu0 %v296
    %v1613 = vpop.f32.mrf.mxu0
    %v1614 = vadd.f32 %v1565, %v1613
    %v1615 = vpop.f32.mrf.mxu0
    %v1616 = vadd.f32 %v1567, %v1615
    %1617 = vmatmul.bf16.gmra.mxu0 %v304
    %v1618 = vpop.f32.mrf.mxu0
    %v1619 = vadd.f32 %v1570, %v1618
    %v1620 = vpop.f32.mrf.mxu0
    %v1621 = vadd.f32 %v1572, %v1620
    %1622 = vmatmul.bf16.gmra.mxu0 %v312
    %v1623 = vpop.f32.mrf.mxu0
    %v1624 = vadd.f32 %v1575, %v1623
    %v1625 = vpop.f32.mrf.mxu0
    %v1626 = vadd.f32 %v1577, %v1625
    %1627 = vmatmul.bf16.gmra.mxu0 %v320
    %v1628 = vpop.f32.mrf.mxu0
    %v1629 = vadd.f32 %v1580, %v1628
    %v1630 = vpop.f32.mrf.mxu0
    %v1631 = vadd.f32 %v1582, %v1630
    %1632 = vdwg.mxu0
    %1633 = vmatpush.bf16.msra.mxu0 %v901
    %1634 = vmatpush.bf16.msra.mxu0 %v899
    %1635 = vmatpush.bf16.msra.mxu0 %v897
    %1636 = vmatpush.bf16.msra.mxu0 %v895
    %1637 = vmatpush.bf16.msra.mxu0 %v893
    %1638 = vmatpush.bf16.msra.mxu0 %v891
    %1639 = vmatpush.bf16.msra.mxu0 %v889
    %1640 = vmatpush.bf16.msra.mxu0 %v887
    %1641 = vmatmul.bf16.gmra.mxu0 %v265
    %v1642 = vpop.f32.mrf.mxu0
    %v1643 = vadd.f32 %v1594, %v1642
    %v1644 = vpop.f32.mrf.mxu0
    %v1645 = vadd.f32 %v1596, %v1644
    %1646 = vmatmul.bf16.gmra.mxu0 %v273
    %v1647 = vpop.f32.mrf.mxu0
    %v1648 = vadd.f32 %v1599, %v1647
    %v1649 = vpop.f32.mrf.mxu0
    %v1650 = vadd.f32 %v1601, %v1649
    %1651 = vmatmul.bf16.gmra.mxu0 %v281
    %v1652 = vpop.f32.mrf.mxu0
    %v1653 = vadd.f32 %v1604, %v1652
    %v1654 = vpop.f32.mrf.mxu0
    %v1655 = vadd.f32 %v1606, %v1654
    %1656 = vmatmul.bf16.gmra.mxu0 %v289
    %v1657 = vpop.f32.mrf.mxu0
    %v1658 = vadd.f32 %v1609, %v1657
    %v1659 = vpop.f32.mrf.mxu0
    %v1660 = vadd.f32 %v1611, %v1659
    %1661 = vmatmul.bf16.gmra.mxu0 %v297
    %v1662 = vpop.f32.mrf.mxu0
    %v1663 = vadd.f32 %v1614, %v1662
    %v1664 = vpop.f32.mrf.mxu0
    %v1665 = vadd.f32 %v1616, %v1664
    %1666 = vmatmul.bf16.gmra.mxu0 %v305
    %v1667 = vpop.f32.mrf.mxu0
    %v1668 = vadd.f32 %v1619, %v1667
    %v1669 = vpop.f32.mrf.mxu0
    %v1670 = vadd.f32 %v1621, %v1669
    %1671 = vmatmul.bf16.gmra.mxu0 %v313
    %v1672 = vpop.f32.mrf.mxu0
    %v1673 = vadd.f32 %v1624, %v1672
    %v1674 = vpop.f32.mrf.mxu0
    %v1675 = vadd.f32 %v1626, %v1674
    %1676 = vmatmul.bf16.gmra.mxu0 %v321
    %v1677 = vpop.f32.mrf.mxu0
    %v1678 = vadd.f32 %v1629, %v1677
    %v1679 = vpop.f32.mrf.mxu0
    %v1680 = vadd.f32 %v1631, %v1679
    %1681 = vdwg.mxu0
    %1682 = vmatpush.bf16.msra.mxu0 %v917
    %1683 = vmatpush.bf16.msra.mxu0 %v915
    %1684 = vmatpush.bf16.msra.mxu0 %v913
    %1685 = vmatpush.bf16.msra.mxu0 %v911
    %1686 = vmatpush.bf16.msra.mxu0 %v909
    %1687 = vmatpush.bf16.msra.mxu0 %v907
    %1688 = vmatpush.bf16.msra.mxu0 %v905
    %1689 = vmatpush.bf16.msra.mxu0 %v903
    %1690 = vmatmul.bf16.gmra.mxu0 %v266
    %v1691 = vpop.f32.mrf.mxu0
    %v1692 = vadd.f32 %v1643, %v1691
    %v1693 = vpop.f32.mrf.mxu0
    %v1694 = vadd.f32 %v1645, %v1693
    %1695 = vmatmul.bf16.gmra.mxu0 %v274
    %v1696 = vpop.f32.mrf.mxu0
    %v1697 = vadd.f32 %v1648, %v1696
    %v1698 = vpop.f32.mrf.mxu0
    %v1699 = vadd.f32 %v1650, %v1698
    %1700 = vmatmul.bf16.gmra.mxu0 %v282
    %v1701 = vpop.f32.mrf.mxu0
    %v1702 = vadd.f32 %v1653, %v1701
    %v1703 = vpop.f32.mrf.mxu0
    %v1704 = vadd.f32 %v1655, %v1703
    %1705 = vmatmul.bf16.gmra.mxu0 %v290
    %v1706 = vpop.f32.mrf.mxu0
    %v1707 = vadd.f32 %v1658, %v1706
    %v1708 = vpop.f32.mrf.mxu0
    %v1709 = vadd.f32 %v1660, %v1708
    %1710 = vmatmul.bf16.gmra.mxu0 %v298
    %v1711 = vpop.f32.mrf.mxu0
    %v1712 = vadd.f32 %v1663, %v1711
    %v1713 = vpop.f32.mrf.mxu0
    %v1714 = vadd.f32 %v1665, %v1713
    %1715 = vmatmul.bf16.gmra.mxu0 %v306
    %v1716 = vpop.f32.mrf.mxu0
    %v1717 = vadd.f32 %v1668, %v1716
    %v1718 = vpop.f32.mrf.mxu0
    %v1719 = vadd.f32 %v1670, %v1718
    %1720 = vmatmul.bf16.gmra.mxu0 %v314
    %v1721 = vpop.f32.mrf.mxu0
    %v1722 = vadd.f32 %v1673, %v1721
    %v1723 = vpop.f32.mrf.mxu0
    %v1724 = vadd.f32 %v1675, %v1723
    %1725 = vmatmul.bf16.gmra.mxu0 %v322
    %v1726 = vpop.f32.mrf.mxu0
    %v1727 = vadd.f32 %v1678, %v1726
    %v1728 = vpop.f32.mrf.mxu0
    %v1729 = vadd.f32 %v1680, %v1728
    %1730 = vdwg.mxu0
    %1731 = vmatpush.bf16.msra.mxu0 %v933
    %1732 = vmatpush.bf16.msra.mxu0 %v931
    %1733 = vmatpush.bf16.msra.mxu0 %v929
    %1734 = vmatpush.bf16.msra.mxu0 %v927
    %1735 = vmatpush.bf16.msra.mxu0 %v925
    %1736 = vmatpush.bf16.msra.mxu0 %v923
    %1737 = vmatpush.bf16.msra.mxu0 %v921
    %1738 = vmatpush.bf16.msra.mxu0 %v919
    %1739 = vmatmul.bf16.gmra.mxu0 %v267
    %v1740 = vpop.f32.mrf.mxu0
    %v1741 = vadd.f32 %v1692, %v1740
    %v1742 = vpop.f32.mrf.mxu0
    %v1743 = vadd.f32 %v1694, %v1742
    %1744 = vmatmul.bf16.gmra.mxu0 %v275
    %v1745 = vpop.f32.mrf.mxu0
    %v1746 = vadd.f32 %v1697, %v1745
    %v1747 = vpop.f32.mrf.mxu0
    %v1748 = vadd.f32 %v1699, %v1747
    %1749 = vmatmul.bf16.gmra.mxu0 %v283
    %v1750 = vpop.f32.mrf.mxu0
    %v1751 = vadd.f32 %v1702, %v1750
    %v1752 = vpop.f32.mrf.mxu0
    %v1753 = vadd.f32 %v1704, %v1752
    %1754 = vmatmul.bf16.gmra.mxu0 %v291
    %v1755 = vpop.f32.mrf.mxu0
    %v1756 = vadd.f32 %v1707, %v1755
    %v1757 = vpop.f32.mrf.mxu0
    %v1758 = vadd.f32 %v1709, %v1757
    %1759 = vmatmul.bf16.gmra.mxu0 %v299
    %v1760 = vpop.f32.mrf.mxu0
    %v1761 = vadd.f32 %v1712, %v1760
    %v1762 = vpop.f32.mrf.mxu0
    %v1763 = vadd.f32 %v1714, %v1762
    %1764 = vmatmul.bf16.gmra.mxu0 %v307
    %v1765 = vpop.f32.mrf.mxu0
    %v1766 = vadd.f32 %v1717, %v1765
    %v1767 = vpop.f32.mrf.mxu0
    %v1768 = vadd.f32 %v1719, %v1767
    %1769 = vmatmul.bf16.gmra.mxu0 %v315
    %v1770 = vpop.f32.mrf.mxu0
    %v1771 = vadd.f32 %v1722, %v1770
    %v1772 = vpop.f32.mrf.mxu0
    %v1773 = vadd.f32 %v1724, %v1772
    %1774 = vmatmul.bf16.gmra.mxu0 %v323
    %v1775 = vpop.f32.mrf.mxu0
    %v1776 = vadd.f32 %v1727, %v1775
    %v1777 = vpop.f32.mrf.mxu0
    %v1778 = vadd.f32 %v1729, %v1777
    %1779 = vdwg.mxu0
    %1780 = vmatpush.bf16.msra.mxu0 %v949
    %1781 = vmatpush.bf16.msra.mxu0 %v947
    %1782 = vmatpush.bf16.msra.mxu0 %v945
    %1783 = vmatpush.bf16.msra.mxu0 %v943
    %1784 = vmatpush.bf16.msra.mxu0 %v941
    %1785 = vmatpush.bf16.msra.mxu0 %v939
    %1786 = vmatpush.bf16.msra.mxu0 %v937
    %1787 = vmatpush.bf16.msra.mxu0 %v935
    %1788 = vmatmul.bf16.gmra.mxu0 %v268
    %v1789 = vpop.f32.mrf.mxu0
    %v1790 = vadd.f32 %v1741, %v1789
    %v1791 = vpop.f32.mrf.mxu0
    %v1792 = vadd.f32 %v1743, %v1791
    %1793 = vmatmul.bf16.gmra.mxu0 %v276
    %v1794 = vpop.f32.mrf.mxu0
    %v1795 = vadd.f32 %v1746, %v1794
    %v1796 = vpop.f32.mrf.mxu0
    %v1797 = vadd.f32 %v1748, %v1796
    %1798 = vmatmul.bf16.gmra.mxu0 %v284
    %v1799 = vpop.f32.mrf.mxu0
    %v1800 = vadd.f32 %v1751, %v1799
    %v1801 = vpop.f32.mrf.mxu0
    %v1802 = vadd.f32 %v1753, %v1801
    %1803 = vmatmul.bf16.gmra.mxu0 %v292
    %v1804 = vpop.f32.mrf.mxu0
    %v1805 = vadd.f32 %v1756, %v1804
    %v1806 = vpop.f32.mrf.mxu0
    %v1807 = vadd.f32 %v1758, %v1806
    %1808 = vmatmul.bf16.gmra.mxu0 %v300
    %v1809 = vpop.f32.mrf.mxu0
    %v1810 = vadd.f32 %v1761, %v1809
    %v1811 = vpop.f32.mrf.mxu0
    %v1812 = vadd.f32 %v1763, %v1811
    %1813 = vmatmul.bf16.gmra.mxu0 %v308
    %v1814 = vpop.f32.mrf.mxu0
    %v1815 = vadd.f32 %v1766, %v1814
    %v1816 = vpop.f32.mrf.mxu0
    %v1817 = vadd.f32 %v1768, %v1816
    %1818 = vmatmul.bf16.gmra.mxu0 %v316
    %v1819 = vpop.f32.mrf.mxu0
    %v1820 = vadd.f32 %v1771, %v1819
    %v1821 = vpop.f32.mrf.mxu0
    %v1822 = vadd.f32 %v1773, %v1821
    %1823 = vmatmul.bf16.gmra.mxu0 %v324
    %v1824 = vpop.f32.mrf.mxu0
    %v1825 = vadd.f32 %v1776, %v1824
    %v1826 = vpop.f32.mrf.mxu0
    %v1827 = vadd.f32 %v1778, %v1826
    %1828 = vdwg.mxu0
    %1829 = vmatpush.bf16.msra.mxu0 %v965
    %1830 = vmatpush.bf16.msra.mxu0 %v963
    %1831 = vmatpush.bf16.msra.mxu0 %v961
    %1832 = vmatpush.bf16.msra.mxu0 %v959
    %1833 = vmatpush.bf16.msra.mxu0 %v957
    %1834 = vmatpush.bf16.msra.mxu0 %v955
    %1835 = vmatpush.bf16.msra.mxu0 %v953
    %1836 = vmatpush.bf16.msra.mxu0 %v951
    %1837 = vmatmul.bf16.gmra.mxu0 %v269
    %v1838 = vpop.f32.mrf.mxu0
    %v1839 = vadd.f32 %v1790, %v1838
    %v1840 = vpop.f32.mrf.mxu0
    %v1841 = vadd.f32 %v1792, %v1840
    %1842 = vmatmul.bf16.gmra.mxu0 %v277
    %v1843 = vpop.f32.mrf.mxu0
    %v1844 = vadd.f32 %v1795, %v1843
    %v1845 = vpop.f32.mrf.mxu0
    %v1846 = vadd.f32 %v1797, %v1845
    %1847 = vmatmul.bf16.gmra.mxu0 %v285
    %v1848 = vpop.f32.mrf.mxu0
    %v1849 = vadd.f32 %v1800, %v1848
    %v1850 = vpop.f32.mrf.mxu0
    %v1851 = vadd.f32 %v1802, %v1850
    %1852 = vmatmul.bf16.gmra.mxu0 %v293
    %v1853 = vpop.f32.mrf.mxu0
    %v1854 = vadd.f32 %v1805, %v1853
    %v1855 = vpop.f32.mrf.mxu0
    %v1856 = vadd.f32 %v1807, %v1855
    %1857 = vmatmul.bf16.gmra.mxu0 %v301
    %v1858 = vpop.f32.mrf.mxu0
    %v1859 = vadd.f32 %v1810, %v1858
    %v1860 = vpop.f32.mrf.mxu0
    %v1861 = vadd.f32 %v1812, %v1860
    %1862 = vmatmul.bf16.gmra.mxu0 %v309
    %v1863 = vpop.f32.mrf.mxu0
    %v1864 = vadd.f32 %v1815, %v1863
    %v1865 = vpop.f32.mrf.mxu0
    %v1866 = vadd.f32 %v1817, %v1865
    %1867 = vmatmul.bf16.gmra.mxu0 %v317
    %v1868 = vpop.f32.mrf.mxu0
    %v1869 = vadd.f32 %v1820, %v1868
    %v1870 = vpop.f32.mrf.mxu0
    %v1871 = vadd.f32 %v1822, %v1870
    %1872 = vmatmul.bf16.gmra.mxu0 %v325
    %v1873 = vpop.f32.mrf.mxu0
    %v1874 = vadd.f32 %v1825, %v1873
    %v1875 = vpop.f32.mrf.mxu0
    %v1876 = vadd.f32 %v1827, %v1875
    %1877 = vdwg.mxu0
    %v1878 = vadd.f32 %v102, %v1447
    %v1879 = vadd.f32 %v103, %v1839
    %v1880 = vadd.f32 %v104, %v1449
    %v1881 = vadd.f32 %v105, %v1841
    %v1882 = vadd.f32 %v106, %v1452
    %v1883 = vadd.f32 %v107, %v1844
    %v1884 = vadd.f32 %v108, %v1454
    %v1885 = vadd.f32 %v109, %v1846
    %v1886 = vadd.f32 %v110, %v1457
    %v1887 = vadd.f32 %v111, %v1849
    %v1888 = vadd.f32 %v112, %v1459
    %v1889 = vadd.f32 %v113, %v1851
    %v1890 = vadd.f32 %v114, %v1462
    %v1891 = vadd.f32 %v115, %v1854
    %v1892 = vadd.f32 %v116, %v1464
    %v1893 = vadd.f32 %v117, %v1856
    %v1894 = vadd.f32 %v118, %v1467
    %v1895 = vadd.f32 %v119, %v1859
    %v1896 = vadd.f32 %v120, %v1469
    %v1897 = vadd.f32 %v121, %v1861
    %v1898 = vadd.f32 %v122, %v1472
    %v1899 = vadd.f32 %v123, %v1864
    %v1900 = vadd.f32 %v124, %v1474
    %v1901 = vadd.f32 %v125, %v1866
    %v1902 = vadd.f32 %v126, %v1477
    %v1903 = vadd.f32 %v127, %v1869
    %v1904 = vadd.f32 %v128, %v1479
    %v1905 = vadd.f32 %v129, %v1871
    %v1906 = vadd.f32 %v130, %v1482
    %v1907 = vadd.f32 %v131, %v1874
    %v1908 = vadd.f32 %v132, %v1484
    %v1909 = vadd.f32 %v133, %v1876
    %1910 = vst [vmem:[#allocation8] sm:$0xff] %v1878
    %1911 = vst [vmem:[#allocation8 + $0x8] sm:$0xff] %v1879
    %1912 = vst [vmem:[#allocation8 + $0x10] sm:$0xff] %v1880
    %1913 = vst [vmem:[#allocation8 + $0x18] sm:$0xff] %v1881
    %1914 = vst [vmem:[#allocation8 + $0x20] sm:$0xff] %v1882
    %1915 = vst [vmem:[#allocation8 + $0x28] sm:$0xff] %v1883
    %1916 = vst [vmem:[#allocation8 + $0x30] sm:$0xff] %v1884
    %1917 = vst [vmem:[#allocation8 + $0x38] sm:$0xff] %v1885
    %1918 = vst [vmem:[#allocation8 + $0x40] sm:$0xff] %v1886
    %1919 = vst [vmem:[#allocation8 + $0x48] sm:$0xff] %v1887
    %1920 = vst [vmem:[#allocation8 + $0x50] sm:$0xff] %v1888
    %1921 = vst [vmem:[#allocation8 + $0x58] sm:$0xff] %v1889
    %1922 = vst [vmem:[#allocation8 + $0x60] sm:$0xff] %v1890
    %1923 = vst [vmem:[#allocation8 + $0x68] sm:$0xff] %v1891
    %1924 = vst [vmem:[#allocation8 + $0x70] sm:$0xff] %v1892
    %1925 = vst [vmem:[#allocation8 + $0x78] sm:$0xff] %v1893
    %1926 = vst [vmem:[#allocation8 + $0x80] sm:$0xff] %v1894
    %1927 = vst [vmem:[#allocation8 + $0x88] sm:$0xff] %v1895
    %1928 = vst [vmem:[#allocation8 + $0x90] sm:$0xff] %v1896
    %1929 = vst [vmem:[#allocation8 + $0x98] sm:$0xff] %v1897
    %1930 = vst [vmem:[#allocation8 + $0xa0] sm:$0xff] %v1898
    %1931 = vst [vmem:[#allocation8 + $0xa8] sm:$0xff] %v1899
    %1932 = vst [vmem:[#allocation8 + $0xb0] sm:$0xff] %v1900
    %1933 = vst [vmem:[#allocation8 + $0xb8] sm:$0xff] %v1901
    %1934 = vst [vmem:[#allocation8 + $0xc0] sm:$0xff] %v1902
    %1935 = vst [vmem:[#allocation8 + $0xc8] sm:$0xff] %v1903
    %1936 = vst [vmem:[#allocation8 + $0xd0] sm:$0xff] %v1904
    %1937 = vst [vmem:[#allocation8 + $0xd8] sm:$0xff] %v1905
    %1938 = vst [vmem:[#allocation8 + $0xe0] sm:$0xff] %v1906
    %1939 = vst [vmem:[#allocation8 + $0xe8] sm:$0xff] %v1907
    %1940 = vst [vmem:[#allocation8 + $0xf0] sm:$0xff] %v1908
    %1941 = vst [vmem:[#allocation8 + $0xf8] sm:$0xff] %v1909
    // Predicated region
    $region30: #{_linear_fwd.1} parent=1 // pred_check
      _
    $region31: #{_linear_fwd.1} parent=1 // pred_check_branch
      %1943 = sbr.rel (0) target = $region33
    $region32: #{_linear_fwd.1} parent=1 // pred_region
      %1945 = vsyncadd [#allocation4], 0
      %s1946 = sshll.u32 [#allocation8], 4
      %s1947 = int_to_ptr.vmem [resolvable:$true] %s1946
      %s1948 = sshll.u32 %s3, 4
      %s1949 = int_to_ptr.hbm [resolvable:$true] %s1948
      %1954 = dma.vmem_to_hbm [thread:$0]  %s1947, 4096, %s1949, [#allocation4], 256, 256, 16
    $region33: #{_linear_fwd.1} parent=1 // pred_fallthru
      _
    // Predicated region
    $region34: #{_linear_fwd.1} parent=1 // pred_check
      _
    $region35: #{_linear_fwd.1} parent=1 // pred_check_branch
      %1956 = sbr.rel (0) target = $region37
    $region36: #{_linear_fwd.1} parent=1 // pred_region
      %1958 = dma.done [#allocation4], 4096
    $region37: #{_linear_fwd.1} parent=1 // pred_fallthru
      _
    %1959 = vsyncpa [#allocation3], 1
    %1960 = vsyncpa [#allocation6], 1
    %1961 = vsyncpa [#allocation4], 1

</llo_original>
